<compile_context>
chip_gen: v5e
topology: v5e:2x2
jax: 0.10.0
libtpu: 0.0.40
codegen_flags: <defaults>
</compile_context>

<pallas_src>
import jax
import jax.numpy as jnp
from jax.experimental import pallas as pl
from jax.experimental.pallas import tpu as pltpu

EPS = 1e-5


def _round_up(n, m):
    return ((n + m - 1) // m) * m


# --------------------------------------------------------------------------
# Kernel: 7 x (matmul + bias + ReLU) then masked softmax over the class lanes.
# --------------------------------------------------------------------------
def chinet_kernel(
    x_ref,                                   # (TB, D_in_pad)  bf16
    mask_ref,                                # (1, CLS_PAD)    f32 additive mask
    w1, b1, w2, b2, w3, b3, w4, b4, w5, b5,  # BN-folded MahjongNet weights
    pw1, pb1, pw2, pb2,                      # policy head weights
    out_ref,                                 # (TB, CLS_PAD)   f32
):
    def linear_relu(h, w_ref, b_ref, out_dtype):
        # bf16 operands on the MXU, f32 accumulation; bias/ReLU in f32 (v5e-
        # safe), then pack activations back to bf16 for the next layer.
        y = jnp.dot(h, w_ref[...], preferred_element_type=jnp.float32)
        return jnp.maximum(y + b_ref[...], 0.0).astype(out_dtype)

    bf16 = jnp.bfloat16
    h = x_ref[...]                              # bf16 input feeds MXU directly
    h = linear_relu(h, w1, b1, bf16)            # fc1 (BN1 folded) + ReLU
    h = linear_relu(h, w2, b2, bf16)            # fc2 (BN2 folded) + ReLU
    h = linear_relu(h, w3, b3, bf16)            # fc3 (BN2 folded) + ReLU
    h = linear_relu(h, w4, b4, bf16)            # fc4 (BN2 folded) + ReLU
    h = linear_relu(h, w5, b5, bf16)            # fc5 (BN2 folded) + ReLU
    h = linear_relu(h, pw1, pb1, bf16)          # policy Linear(256,256) + ReLU
    logits = linear_relu(h, pw2, pb2, jnp.float32)   # Linear(256,4->128) + ReLU

    # Softmax over the real class lanes (pad lanes carry -1e30 in the mask).
    masked = logits + mask_ref[...]
    m = jnp.max(masked, axis=-1, keepdims=True)
    e = jnp.exp(masked - m)
    denom = jnp.sum(e, axis=-1, keepdims=True)
    out_ref[...] = e / denom                    # exact normalization (free)


# --------------------------------------------------------------------------
# BN folding: y = ((x - mean) * rsqrt(var+eps) * gamma + beta) @ W + b
#           = x @ (scale[:,None] * W) + (shift @ W + b)
# --------------------------------------------------------------------------
def _fold_bn_linear(bn, w, b):
    gamma, beta, mean, var = bn[0], bn[1], bn[2], bn[3]
    scale = gamma * jax.lax.rsqrt(var + EPS)
    shift = beta - mean * scale
    return w * scale[:, None], b + shift @ w


def prepare_weights(params):
    """Fold eval-mode BN into the Linears, pad, cast to bf16 — done ONCE,
    outside the per-call path (weights are then just DMA'd by the kernel)."""
    d_in = params["w1"].shape[0]
    n_classes = params["pw2"].shape[1]
    d_in_pad = _round_up(d_in, 128)
    cls_pad = _round_up(n_classes, 128)

    w1, b1 = _fold_bn_linear(params["bn1"], params["w1"], params["b1"])
    w1 = jnp.pad(w1, ((0, d_in_pad - d_in), (0, 0)))
    folded = [(w1, b1)]
    for k in ("2", "3", "4", "5"):
        folded.append(
            _fold_bn_linear(params["bn2"], params["w" + k], params["b" + k]))
    folded.append((params["pw1"], params["pb1"]))
    pw2 = jnp.pad(params["pw2"], ((0, 0), (0, cls_pad - n_classes)))
    pb2 = jnp.pad(params["pb2"], ((0, 0), (0, cls_pad - n_classes)))
    folded.append((pw2, pb2))

    args = []
    for w, b in folded:
        args.append(w.astype(jnp.bfloat16))
        args.append(b.reshape(1, -1).astype(jnp.float32))

    # Additive softmax mask: 0 on real class lanes, -1e30 on padding lanes.
    mask = jnp.where(jnp.arange(cls_pad) < n_classes, 0.0, -1e30)
    mask = mask.reshape(1, cls_pad).astype(jnp.float32)
    return (mask,) + tuple(args)


# --------------------------------------------------------------------------
# Batch-tile selection: multiple of 8, capped at max_tb, and >= 2 grid steps
# whenever B >= 16 so the parallel batch axis spans both TCs on v7x.
# --------------------------------------------------------------------------
def _pick_tb(b_rows, max_tb=1024):
    b8 = _round_up(max(b_rows, 1), 8)
    if b8 < 16:
        return b8
    return min(max_tb, _round_up((b8 + 1) // 2, 8))


# --------------------------------------------------------------------------
# Wrapper (weights already prepared by `prepare_weights`)
# --------------------------------------------------------------------------
def chinet_forward(x, prepared, n_classes=4, max_tb=1024):
    mask = prepared[0]
    weight_args = prepared[1:]

    B, d_in = x.shape
    d_in_pad = weight_args[0].shape[0]
    cls_pad = mask.shape[1]

    tb = _pick_tb(B, max_tb)
    b_pad = _round_up(_round_up(B, 8), tb)

    # bf16 input block: halves the only per-sample HBM stream.
    x_pad = jnp.zeros((b_pad, d_in_pad), jnp.bfloat16)
    x_pad = x_pad.at[:B, :d_in].set(x.astype(jnp.bfloat16))

    const_map = lambda i: (0, 0)
    in_specs = [pl.BlockSpec((tb, d_in_pad), lambda i: (i, 0)),
                pl.BlockSpec(mask.shape, const_map)]
    in_specs += [pl.BlockSpec(a.shape, const_map) for a in weight_args]
    out_spec = pl.BlockSpec((tb, cls_pad), lambda i: (i, 0))

    out = pl.pallas_call(
        chinet_kernel,
        out_shape=jax.ShapeDtypeStruct((b_pad, cls_pad), jnp.float32),
        grid=(b_pad // tb,),
        in_specs=in_specs,
        out_specs=out_spec,
        compiler_params=pltpu.CompilerParams(
            dimension_semantics=("parallel",)),
    )(x_pad, mask, *weight_args)

    return out[:B, :n_classes]


# --------------------------------------------------------------------------
# Pure-JAX reference (eval-mode BN, identity dropout) for correctness check.
# --------------------------------------------------------------------------
def chinet_reference(x, params):
    def bn(h, b):
        gamma, beta, mean, var = b[0], b[1], b[2], b[3]
        return (h - mean) * jax.lax.rsqrt(var + EPS) * gamma + beta

    def lr(h, w, b):
        return jnp.maximum(h @ w + b, 0.0)

    h = bn(x, params["bn1"])
    h = lr(h, params["w1"], params["b1"])
    h = lr(bn(h, params["bn2"]), params["w2"], params["b2"])
    h = lr(bn(h, params["bn2"]), params["w3"], params["b3"])
    h = lr(bn(h, params["bn2"]), params["w4"], params["b4"])
    h = lr(bn(h, params["bn2"]), params["w5"], params["b5"])
    h = lr(h, params["pw1"], params["pb1"])
    logits = lr(h, params["pw2"], params["pb2"])
    return jax.nn.softmax(logits, axis=-1)


# --------------------------------------------------------------------------
# Deterministic synthetic parameters (PyTorch-ish uniform scaling).
# --------------------------------------------------------------------------
def init_params(key, d_in, hidden=256, out=256, n_classes=4):
    ks = jax.random.split(key, 24)

    def lin(kw, kb, fan_in, fan_out):
        bound = 1.0 / jnp.sqrt(fan_in)
        w = jax.random.uniform(kw, (fan_in, fan_out), jnp.float32, -bound, bound)
        b = jax.random.uniform(kb, (1, fan_out), jnp.float32, -bound, bound)
        return w, b

    def bn(kg, kb, km, kv, d):
        gamma = 1.0 + 0.1 * jax.random.normal(kg, (d,), jnp.float32)
        beta = 0.1 * jax.random.normal(kb, (d,), jnp.float32)
        mean = 0.1 * jax.random.normal(km, (d,), jnp.float32)
        var = jax.random.uniform(kv, (d,), jnp.float32, 0.5, 1.5)
        return jnp.stack([gamma, beta, mean, var], axis=0)  # (4, d)

    p = {}
    p["bn1"] = bn(ks[0], ks[1], ks[2], ks[3], d_in)
    p["bn2"] = bn(ks[4], ks[5], ks[6], ks[7], hidden)
    p["w1"], p["b1"] = lin(ks[8], ks[9], d_in, hidden)
    p["w2"], p["b2"] = lin(ks[10], ks[11], hidden, hidden)
    p["w3"], p["b3"] = lin(ks[12], ks[13], hidden, hidden)
    p["w4"], p["b4"] = lin(ks[14], ks[15], hidden, hidden)
    p["w5"], p["b5"] = lin(ks[16], ks[17], hidden, out)
    p["pw1"], p["pb1"] = lin(ks[18], ks[19], out, 256)
    p["pw2"], p["pb2"] = lin(ks[20], ks[21], 256, n_classes)
    return p


if __name__ == "__main__":
    B, D_IN = 8, 64

    key = jax.random.PRNGKey(0)
    kx, kp = jax.random.split(key)
    x = jax.random.normal(kx, (B, D_IN), jnp.float32)
    params = init_params(kp, D_IN)

    # Weight preparation (BN folding / padding / bf16 cast) happens ONCE here,
    # outside the per-call path.
    prepared = prepare_weights(params)

    fwd = jax.jit(chinet_forward)
    out = jax.block_until_ready(fwd(x, prepared))

    assert out.shape == (B, 4)
    # rows of a softmax must sum to ~1 (exact divide -> tight tolerance)
    assert jnp.allclose(jnp.sum(out, axis=1), 1.0, atol=1e-3)

    # compare against the pure-JAX f32 reference (bf16 weights -> loose tol)
    ref = chinet_reference(x, params)
    assert jnp.allclose(out, ref, atol=5e-2), float(jnp.max(jnp.abs(out - ref)))

    print("KERNEL_OK")
</pallas_src>

<mosaic_0001>
module attributes {stable_mosaic.version = 11 : i64} {
  func.func @chinet_kernel(%arg0: i32, %arg1: memref<8x128xbf16, #tpu.memory_space<vmem>>, %arg2: memref<1x128xf32, #tpu.memory_space<vmem>>, %arg3: memref<128x256xbf16, #tpu.memory_space<vmem>>, %arg4: memref<1x256xf32, #tpu.memory_space<vmem>>, %arg5: memref<256x256xbf16, #tpu.memory_space<vmem>>, %arg6: memref<1x256xf32, #tpu.memory_space<vmem>>, %arg7: memref<256x256xbf16, #tpu.memory_space<vmem>>, %arg8: memref<1x256xf32, #tpu.memory_space<vmem>>, %arg9: memref<256x256xbf16, #tpu.memory_space<vmem>>, %arg10: memref<1x256xf32, #tpu.memory_space<vmem>>, %arg11: memref<256x256xbf16, #tpu.memory_space<vmem>>, %arg12: memref<1x256xf32, #tpu.memory_space<vmem>>, %arg13: memref<256x256xbf16, #tpu.memory_space<vmem>>, %arg14: memref<1x256xf32, #tpu.memory_space<vmem>>, %arg15: memref<256x128xbf16, #tpu.memory_space<vmem>>, %arg16: memref<1x128xf32, #tpu.memory_space<vmem>>, %arg17: memref<8x128xf32, #tpu.memory_space<vmem>>) attributes {dimension_semantics = [#tpu.dimension_semantics<parallel>], iteration_bounds = array<i64: 1>, scalar_prefetch = 0 : i64, scratch_operands = 0 : i64, tpu.core_type = #tpu.core_type<tc>, window_params = [{transform_indices = @transform_0, window_bounds = array<i64: 8, 128>}, {pipeline_mode = #tpu.pipeline_mode<synchronous>, transform_indices = @transform_1, window_bounds = array<i64: 1, 128>}, {pipeline_mode = #tpu.pipeline_mode<synchronous>, transform_indices = @transform_2, window_bounds = array<i64: 128, 256>}, {pipeline_mode = #tpu.pipeline_mode<synchronous>, transform_indices = @transform_3, window_bounds = array<i64: 1, 256>}, {pipeline_mode = #tpu.pipeline_mode<synchronous>, transform_indices = @transform_4, window_bounds = array<i64: 256, 256>}, {pipeline_mode = #tpu.pipeline_mode<synchronous>, transform_indices = @transform_5, window_bounds = array<i64: 1, 256>}, {pipeline_mode = #tpu.pipeline_mode<synchronous>, transform_indices = @transform_6, window_bounds = array<i64: 256, 256>}, {pipeline_mode = #tpu.pipeline_mode<synchronous>, transform_indices = @transform_7, window_bounds = array<i64: 1, 256>}, {pipeline_mode = #tpu.pipeline_mode<synchronous>, transform_indices = @transform_8, window_bounds = array<i64: 256, 256>}, {pipeline_mode = #tpu.pipeline_mode<synchronous>, transform_indices = @transform_9, window_bounds = array<i64: 1, 256>}, {pipeline_mode = #tpu.pipeline_mode<synchronous>, transform_indices = @transform_10, window_bounds = array<i64: 256, 256>}, {pipeline_mode = #tpu.pipeline_mode<synchronous>, transform_indices = @transform_11, window_bounds = array<i64: 1, 256>}, {pipeline_mode = #tpu.pipeline_mode<synchronous>, transform_indices = @transform_12, window_bounds = array<i64: 256, 256>}, {pipeline_mode = #tpu.pipeline_mode<synchronous>, transform_indices = @transform_13, window_bounds = array<i64: 1, 256>}, {pipeline_mode = #tpu.pipeline_mode<synchronous>, transform_indices = @transform_14, window_bounds = array<i64: 256, 128>}, {pipeline_mode = #tpu.pipeline_mode<synchronous>, transform_indices = @transform_15, window_bounds = array<i64: 1, 128>}, {transform_indices = @transform_16, window_bounds = array<i64: 8, 128>}]} {
    %c0 = arith.constant 0 : index
    %c0_0 = arith.constant 0 : index
    %0 = vector.load %arg1[%c0, %c0_0] : memref<8x128xbf16, #tpu.memory_space<vmem>>, vector<8x128xbf16>
    %c0_1 = arith.constant 0 : index
    %c0_2 = arith.constant 0 : index
    %1 = vector.load %arg3[%c0_1, %c0_2] : memref<128x256xbf16, #tpu.memory_space<vmem>>, vector<128x256xbf16>
    %cst = arith.constant dense<0.000000e+00> : vector<8x256xf32>
    %2 = tpu.matmul %0, %1, %cst {dimension_numbers = #tpu.dot_dimension_numbers<[1], [0], [0], [1], [0, 0, 1, 1], [], []>} : vector<8x128xbf16>, vector<128x256xbf16>, vector<8x256xf32> -> vector<8x256xf32>
    %c0_3 = arith.constant 0 : index
    %c0_4 = arith.constant 0 : index
    %3 = vector.load %arg4[%c0_3, %c0_4] : memref<1x256xf32, #tpu.memory_space<vmem>>, vector<1x256xf32>
    %4 = vector.broadcast %3 : vector<1x256xf32> to vector<8x256xf32>
    %5 = arith.addf %2, %4 : vector<8x256xf32>
    %cst_5 = arith.constant 0.000000e+00 : f32
    %6 = vector.broadcast %cst_5 : f32 to vector<8x256xf32>
    %7 = arith.maximumf %5, %6 : vector<8x256xf32>
    %8 = arith.truncf %7 : vector<8x256xf32> to vector<8x256xbf16>
    %c0_6 = arith.constant 0 : index
    %c0_7 = arith.constant 0 : index
    %9 = vector.load %arg5[%c0_6, %c0_7] : memref<256x256xbf16, #tpu.memory_space<vmem>>, vector<256x256xbf16>
    %cst_8 = arith.constant dense<0.000000e+00> : vector<8x256xf32>
    %10 = tpu.matmul %8, %9, %cst_8 {dimension_numbers = #tpu.dot_dimension_numbers<[1], [0], [0], [1], [0, 0, 1, 1], [], []>} : vector<8x256xbf16>, vector<256x256xbf16>, vector<8x256xf32> -> vector<8x256xf32>
    %c0_9 = arith.constant 0 : index
    %c0_10 = arith.constant 0 : index
    %11 = vector.load %arg6[%c0_9, %c0_10] : memref<1x256xf32, #tpu.memory_space<vmem>>, vector<1x256xf32>
    %12 = vector.broadcast %11 : vector<1x256xf32> to vector<8x256xf32>
    %13 = arith.addf %10, %12 : vector<8x256xf32>
    %cst_11 = arith.constant 0.000000e+00 : f32
    %14 = vector.broadcast %cst_11 : f32 to vector<8x256xf32>
    %15 = arith.maximumf %13, %14 : vector<8x256xf32>
    %16 = arith.truncf %15 : vector<8x256xf32> to vector<8x256xbf16>
    %c0_12 = arith.constant 0 : index
    %c0_13 = arith.constant 0 : index
    %17 = vector.load %arg7[%c0_12, %c0_13] : memref<256x256xbf16, #tpu.memory_space<vmem>>, vector<256x256xbf16>
    %cst_14 = arith.constant dense<0.000000e+00> : vector<8x256xf32>
    %18 = tpu.matmul %16, %17, %cst_14 {dimension_numbers = #tpu.dot_dimension_numbers<[1], [0], [0], [1], [0, 0, 1, 1], [], []>} : vector<8x256xbf16>, vector<256x256xbf16>, vector<8x256xf32> -> vector<8x256xf32>
    %c0_15 = arith.constant 0 : index
    %c0_16 = arith.constant 0 : index
    %19 = vector.load %arg8[%c0_15, %c0_16] : memref<1x256xf32, #tpu.memory_space<vmem>>, vector<1x256xf32>
    %20 = vector.broadcast %19 : vector<1x256xf32> to vector<8x256xf32>
    %21 = arith.addf %18, %20 : vector<8x256xf32>
    %cst_17 = arith.constant 0.000000e+00 : f32
    %22 = vector.broadcast %cst_17 : f32 to vector<8x256xf32>
    %23 = arith.maximumf %21, %22 : vector<8x256xf32>
    %24 = arith.truncf %23 : vector<8x256xf32> to vector<8x256xbf16>
    %c0_18 = arith.constant 0 : index
    %c0_19 = arith.constant 0 : index
    %25 = vector.load %arg9[%c0_18, %c0_19] : memref<256x256xbf16, #tpu.memory_space<vmem>>, vector<256x256xbf16>
    %cst_20 = arith.constant dense<0.000000e+00> : vector<8x256xf32>
    %26 = tpu.matmul %24, %25, %cst_20 {dimension_numbers = #tpu.dot_dimension_numbers<[1], [0], [0], [1], [0, 0, 1, 1], [], []>} : vector<8x256xbf16>, vector<256x256xbf16>, vector<8x256xf32> -> vector<8x256xf32>
    %c0_21 = arith.constant 0 : index
    %c0_22 = arith.constant 0 : index
    %27 = vector.load %arg10[%c0_21, %c0_22] : memref<1x256xf32, #tpu.memory_space<vmem>>, vector<1x256xf32>
    %28 = vector.broadcast %27 : vector<1x256xf32> to vector<8x256xf32>
    %29 = arith.addf %26, %28 : vector<8x256xf32>
    %cst_23 = arith.constant 0.000000e+00 : f32
    %30 = vector.broadcast %cst_23 : f32 to vector<8x256xf32>
    %31 = arith.maximumf %29, %30 : vector<8x256xf32>
    %32 = arith.truncf %31 : vector<8x256xf32> to vector<8x256xbf16>
    %c0_24 = arith.constant 0 : index
    %c0_25 = arith.constant 0 : index
    %33 = vector.load %arg11[%c0_24, %c0_25] : memref<256x256xbf16, #tpu.memory_space<vmem>>, vector<256x256xbf16>
    %cst_26 = arith.constant dense<0.000000e+00> : vector<8x256xf32>
    %34 = tpu.matmul %32, %33, %cst_26 {dimension_numbers = #tpu.dot_dimension_numbers<[1], [0], [0], [1], [0, 0, 1, 1], [], []>} : vector<8x256xbf16>, vector<256x256xbf16>, vector<8x256xf32> -> vector<8x256xf32>
    %c0_27 = arith.constant 0 : index
    %c0_28 = arith.constant 0 : index
    %35 = vector.load %arg12[%c0_27, %c0_28] : memref<1x256xf32, #tpu.memory_space<vmem>>, vector<1x256xf32>
    %36 = vector.broadcast %35 : vector<1x256xf32> to vector<8x256xf32>
    %37 = arith.addf %34, %36 : vector<8x256xf32>
    %cst_29 = arith.constant 0.000000e+00 : f32
    %38 = vector.broadcast %cst_29 : f32 to vector<8x256xf32>
    %39 = arith.maximumf %37, %38 : vector<8x256xf32>
    %40 = arith.truncf %39 : vector<8x256xf32> to vector<8x256xbf16>
    %c0_30 = arith.constant 0 : index
    %c0_31 = arith.constant 0 : index
    %41 = vector.load %arg13[%c0_30, %c0_31] : memref<256x256xbf16, #tpu.memory_space<vmem>>, vector<256x256xbf16>
    %cst_32 = arith.constant dense<0.000000e+00> : vector<8x256xf32>
    %42 = tpu.matmul %40, %41, %cst_32 {dimension_numbers = #tpu.dot_dimension_numbers<[1], [0], [0], [1], [0, 0, 1, 1], [], []>} : vector<8x256xbf16>, vector<256x256xbf16>, vector<8x256xf32> -> vector<8x256xf32>
    %c0_33 = arith.constant 0 : index
    %c0_34 = arith.constant 0 : index
    %43 = vector.load %arg14[%c0_33, %c0_34] : memref<1x256xf32, #tpu.memory_space<vmem>>, vector<1x256xf32>
    %44 = vector.broadcast %43 : vector<1x256xf32> to vector<8x256xf32>
    %45 = arith.addf %42, %44 : vector<8x256xf32>
    %cst_35 = arith.constant 0.000000e+00 : f32
    %46 = vector.broadcast %cst_35 : f32 to vector<8x256xf32>
    %47 = arith.maximumf %45, %46 : vector<8x256xf32>
    %48 = arith.truncf %47 : vector<8x256xf32> to vector<8x256xbf16>
    %c0_36 = arith.constant 0 : index
    %c0_37 = arith.constant 0 : index
    %49 = vector.load %arg15[%c0_36, %c0_37] : memref<256x128xbf16, #tpu.memory_space<vmem>>, vector<256x128xbf16>
    %cst_38 = arith.constant dense<0.000000e+00> : vector<8x128xf32>
    %50 = tpu.matmul %48, %49, %cst_38 {dimension_numbers = #tpu.dot_dimension_numbers<[1], [0], [0], [1], [0, 0, 1, 1], [], []>} : vector<8x256xbf16>, vector<256x128xbf16>, vector<8x128xf32> -> vector<8x128xf32>
    %c0_39 = arith.constant 0 : index
    %c0_40 = arith.constant 0 : index
    %51 = vector.load %arg16[%c0_39, %c0_40] : memref<1x128xf32, #tpu.memory_space<vmem>>, vector<1x128xf32>
    %52 = vector.broadcast %51 : vector<1x128xf32> to vector<8x128xf32>
    %53 = arith.addf %50, %52 : vector<8x128xf32>
    %cst_41 = arith.constant 0.000000e+00 : f32
    %54 = vector.broadcast %cst_41 : f32 to vector<8x128xf32>
    %55 = arith.maximumf %53, %54 : vector<8x128xf32>
    %c0_42 = arith.constant 0 : index
    %c0_43 = arith.constant 0 : index
    %56 = vector.load %arg2[%c0_42, %c0_43] : memref<1x128xf32, #tpu.memory_space<vmem>>, vector<1x128xf32>
    %57 = vector.broadcast %56 : vector<1x128xf32> to vector<8x128xf32>
    %58 = arith.addf %55, %57 : vector<8x128xf32>
    %cst_44 = arith.constant dense<0xFF800000> : vector<8xf32>
    %59 = vector.multi_reduction <maximumf>, %58, %cst_44 [1] : vector<8x128xf32> to vector<8xf32>
    %60 = vector.shape_cast %59 : vector<8xf32> to vector<8x1xf32>
    %61 = vector.broadcast %60 : vector<8x1xf32> to vector<8x128xf32>
    %62 = arith.subf %58, %61 : vector<8x128xf32>
    %63 = math.exp %62 : vector<8x128xf32>
    %cst_45 = arith.constant dense<0.000000e+00> : vector<8xf32>
    %64 = vector.multi_reduction <add>, %63, %cst_45 [1] : vector<8x128xf32> to vector<8xf32>
    %65 = vector.shape_cast %64 : vector<8xf32> to vector<8x1xf32>
    %66 = vector.broadcast %65 : vector<8x1xf32> to vector<8x128xf32>
    %67 = arith.divf %63, %66 : vector<8x128xf32>
    %c0_46 = arith.constant 0 : index
    %c0_47 = arith.constant 0 : index
    %68 = vector.load %arg17[%c0_46, %c0_47] : memref<8x128xf32, #tpu.memory_space<vmem>>, vector<8x128xf32>
    tpu.vector_store %arg17[%c0_46, %c0_47], %67 {strides = array<i32>} : memref<8x128xf32, #tpu.memory_space<vmem>>, vector<8x128xf32>,
    return
  }
  func.func @transform_0(%arg0: i32) -> (i32, i32) {
    %c0_i32 = arith.constant 0 : i32
    %c0_i32_0 = arith.constant 0 : i32
    return %arg0, %c0_i32 : i32, i32
  }
  func.func @transform_1(%arg0: i32) -> (i32, i32) {
    %c0_i32 = arith.constant 0 : i32
    %c0_i32_0 = arith.constant 0 : i32
    %c0_i32_1 = arith.constant 0 : i32
    return %c0_i32, %c0_i32_0 : i32, i32
  }
  func.func @transform_2(%arg0: i32) -> (i32, i32) {
    %c0_i32 = arith.constant 0 : i32
    %c0_i32_0 = arith.constant 0 : i32
    %c0_i32_1 = arith.constant 0 : i32
    return %c0_i32, %c0_i32_0 : i32, i32
  }
  func.func @transform_3(%arg0: i32) -> (i32, i32) {
    %c0_i32 = arith.constant 0 : i32
    %c0_i32_0 = arith.constant 0 : i32
    %c0_i32_1 = arith.constant 0 : i32
    return %c0_i32, %c0_i32_0 : i32, i32
  }
  func.func @transform_4(%arg0: i32) -> (i32, i32) {
    %c0_i32 = arith.constant 0 : i32
    %c0_i32_0 = arith.constant 0 : i32
    %c0_i32_1 = arith.constant 0 : i32
    return %c0_i32, %c0_i32_0 : i32, i32
  }
  func.func @transform_5(%arg0: i32) -> (i32, i32) {
    %c0_i32 = arith.constant 0 : i32
    %c0_i32_0 = arith.constant 0 : i32
    %c0_i32_1 = arith.constant 0 : i32
    return %c0_i32, %c0_i32_0 : i32, i32
  }
  func.func @transform_6(%arg0: i32) -> (i32, i32) {
    %c0_i32 = arith.constant 0 : i32
    %c0_i32_0 = arith.constant 0 : i32
    %c0_i32_1 = arith.constant 0 : i32
    return %c0_i32, %c0_i32_0 : i32, i32
  }
  func.func @transform_7(%arg0: i32) -> (i32, i32) {
    %c0_i32 = arith.constant 0 : i32
    %c0_i32_0 = arith.constant 0 : i32
    %c0_i32_1 = arith.constant 0 : i32
    return %c0_i32, %c0_i32_0 : i32, i32
  }
  func.func @transform_8(%arg0: i32) -> (i32, i32) {
    %c0_i32 = arith.constant 0 : i32
    %c0_i32_0 = arith.constant 0 : i32
    %c0_i32_1 = arith.constant 0 : i32
    return %c0_i32, %c0_i32_0 : i32, i32
  }
  func.func @transform_9(%arg0: i32) -> (i32, i32) {
    %c0_i32 = arith.constant 0 : i32
    %c0_i32_0 = arith.constant 0 : i32
    %c0_i32_1 = arith.constant 0 : i32
    return %c0_i32, %c0_i32_0 : i32, i32
  }
  func.func @transform_10(%arg0: i32) -> (i32, i32) {
    %c0_i32 = arith.constant 0 : i32
    %c0_i32_0 = arith.constant 0 : i32
    %c0_i32_1 = arith.constant 0 : i32
    return %c0_i32, %c0_i32_0 : i32, i32
  }
  func.func @transform_11(%arg0: i32) -> (i32, i32) {
    %c0_i32 = arith.constant 0 : i32
    %c0_i32_0 = arith.constant 0 : i32
    %c0_i32_1 = arith.constant 0 : i32
    return %c0_i32, %c0_i32_0 : i32, i32
  }
  func.func @transform_12(%arg0: i32) -> (i32, i32) {
    %c0_i32 = arith.constant 0 : i32
    %c0_i32_0 = arith.constant 0 : i32
    %c0_i32_1 = arith.constant 0 : i32
    return %c0_i32, %c0_i32_0 : i32, i32
  }
  func.func @transform_13(%arg0: i32) -> (i32, i32) {
    %c0_i32 = arith.constant 0 : i32
    %c0_i32_0 = arith.constant 0 : i32
    %c0_i32_1 = arith.constant 0 : i32
    return %c0_i32, %c0_i32_0 : i32, i32
  }
  func.func @transform_14(%arg0: i32) -> (i32, i32) {
    %c0_i32 = arith.constant 0 : i32
    %c0_i32_0 = arith.constant 0 : i32
    %c0_i32_1 = arith.constant 0 : i32
    return %c0_i32, %c0_i32_0 : i32, i32
  }
  func.func @transform_15(%arg0: i32) -> (i32, i32) {
    %c0_i32 = arith.constant 0 : i32
    %c0_i32_0 = arith.constant 0 : i32
    %c0_i32_1 = arith.constant 0 : i32
    return %c0_i32, %c0_i32_0 : i32, i32
  }
  func.func @transform_16(%arg0: i32) -> (i32, i32) {
    %c0_i32 = arith.constant 0 : i32
    %c0_i32_0 = arith.constant 0 : i32
    return %arg0, %c0_i32 : i32, i32
  }
}

</mosaic_0001>

<llo_original>
// kernel: chinet_forward.1
$region0: #{chinet_forward.1}
  #allocation0 [shape = 'u32[]', space=smem, size = 0x4, offset = 0x4, fixed_abs, tag = 'smem constant byte address 0x4 - core index']
  #allocation1 [shape = 'u32[72,128]{1,0:T(1,128)}', space=vmem, size = 0x9000, scoped, tag = 'internal scratch']
  %s0 = inlined_call_operand.vmem [shape: bf16[8,128], index: 0, kind: input, shape index: {}]
  %s1 = inlined_call_operand.vmem [shape: f32[1,128], index: 1, kind: input, shape index: {}]
  %s2 = inlined_call_operand.hbm [shape: bf16[128,256], index: 2, kind: input, shape index: {}]
  %s3 = inlined_call_operand.vmem [shape: f32[1,256], index: 3, kind: input, shape index: {}]
  %s4 = inlined_call_operand.hbm [shape: bf16[256,256], index: 4, kind: input, shape index: {}]
  %s5 = inlined_call_operand.vmem [shape: f32[1,256], index: 5, kind: input, shape index: {}]
  %s6 = inlined_call_operand.hbm [shape: bf16[256,256], index: 6, kind: input, shape index: {}]
  %s7 = inlined_call_operand.vmem [shape: f32[1,256], index: 7, kind: input, shape index: {}]
  %s8 = inlined_call_operand.hbm [shape: bf16[256,256], index: 8, kind: input, shape index: {}]
  %s9 = inlined_call_operand.vmem [shape: f32[1,256], index: 9, kind: input, shape index: {}]
  %s10 = inlined_call_operand.hbm [shape: bf16[256,256], index: 10, kind: input, shape index: {}]
  %s11 = inlined_call_operand.vmem [shape: f32[1,256], index: 11, kind: input, shape index: {}]
  %s12 = inlined_call_operand.hbm [shape: bf16[256,256], index: 12, kind: input, shape index: {}]
  %s13 = inlined_call_operand.vmem [shape: f32[1,256], index: 13, kind: input, shape index: {}]
  %s14 = inlined_call_operand.hbm [shape: bf16[256,128], index: 14, kind: input, shape index: {}]
  %s15 = inlined_call_operand.vmem [shape: f32[1,128], index: 15, kind: input, shape index: {}]
  %s16 = inlined_call_operand.vmem [shape: f32[8,128], index: 16, kind: output, shape index: {}]
  %s17 = sld [smem:[#allocation0]]
  $region102: #{chinet_forward.1} parent=0
    _
  %s19 = ssub.s32 1, %s17
  %s20 = scalar_select 0, %s19, %s17
  $region1: #{chinet_forward.1} parent=0
    #allocation2 [shape = 'u8[65536]{0}', space=vmem, size = 0x10000, scoped, tag = 'input window, operand 2, single buffered']
    #allocation3 [shape = 's32[1]{0}', space=sflag, size = 0x4, scoped, tag = 'scoped memory for chinet_forward.1']
    #allocation4 [shape = 'u8[131072]{0}', space=vmem, size = 0x20000, scoped, tag = 'input window, operand 4, single buffered']
    #allocation5 [shape = 's32[1]{0}', space=sflag, size = 0x4, scoped, tag = 'scoped memory for chinet_forward.1']
    #allocation6 [shape = 'u8[131072]{0}', space=vmem, size = 0x20000, scoped, tag = 'input window, operand 6, single buffered']
    #allocation7 [shape = 'u8[131072]{0}', space=vmem, size = 0x20000, scoped, tag = 'input window, operand 8, single buffered']
    #allocation8 [shape = 's32[1]{0}', space=sflag, size = 0x4, scoped, tag = 'scoped memory for chinet_forward.1']
    #allocation9 [shape = 'u8[131072]{0}', space=vmem, size = 0x20000, scoped, tag = 'input window, operand 10, single buffered']
    #allocation10 [shape = 'u8[131072]{0}', space=vmem, size = 0x20000, scoped, tag = 'input window, operand 12, single buffered']
    #allocation11 [shape = 's32[1]{0}', space=sflag, size = 0x4, scoped, tag = 'scoped memory for chinet_forward.1']
    #allocation12 [shape = 'u8[65536]{0}', space=vmem, size = 0x10000, scoped, tag = 'input window, operand 14, single buffered']
    %21 = vsyncpa [#allocation3], 0
    %22 = vsyncpa [#allocation5], 0
    %23 = vsyncpa [#allocation8], 0
    %24 = vsyncpa [#allocation11], 0
    // Predicated region
    $region2: #{chinet_forward.1} parent=1 // pred_check
      _
    $region3: #{chinet_forward.1} parent=1 // pred_check_branch
      %26 = sbr.rel (0) target = $region5
    $region4: #{chinet_forward.1} parent=1 // pred_region
      _
    $region5: #{chinet_forward.1} parent=1 // pred_fallthru
      _
    // Predicated region
    $region6: #{chinet_forward.1} parent=1 // pred_check
      _
    $region7: #{chinet_forward.1} parent=1 // pred_check_branch
      %28 = sbr.rel (0) target = $region9
    $region8: #{chinet_forward.1} parent=1 // pred_region
      _
    $region9: #{chinet_forward.1} parent=1 // pred_fallthru
      _
    // Predicated region
    $region10: #{chinet_forward.1} parent=1 // pred_check
      _
    $region11: #{chinet_forward.1} parent=1 // pred_check_branch
      %30 = sbr.rel (0) target = $region13
    $region12: #{chinet_forward.1} parent=1 // pred_region
      %32 = vsyncadd [#allocation3], 0
      %s33 = sshll.u32 %s2, 4
      %s34 = int_to_ptr.hbm [resolvable:$true] %s33
      %s35 = sshll.u32 [#allocation2], 4
      %s36 = int_to_ptr.vmem [resolvable:$true] %s35
      %41 = dma.hbm_to_vmem [thread:$0]  %s34, 2048, %s36, [#allocation3], 128, 128, 8
    $region13: #{chinet_forward.1} parent=1 // pred_fallthru
      _
    // Predicated region
    $region14: #{chinet_forward.1} parent=1 // pred_check
      _
    $region15: #{chinet_forward.1} parent=1 // pred_check_branch
      %43 = sbr.rel (0) target = $region17
    $region16: #{chinet_forward.1} parent=1 // pred_region
      _
    $region17: #{chinet_forward.1} parent=1 // pred_fallthru
      _
    // Predicated region
    $region18: #{chinet_forward.1} parent=1 // pred_check
      _
    $region19: #{chinet_forward.1} parent=1 // pred_check_branch
      %45 = sbr.rel (0) target = $region21
    $region20: #{chinet_forward.1} parent=1 // pred_region
      %47 = vsyncadd [#allocation5], 0
      %s48 = sshll.u32 %s4, 4
      %s49 = int_to_ptr.hbm [resolvable:$true] %s48
      %s50 = sshll.u32 [#allocation4], 4
      %s51 = int_to_ptr.vmem [resolvable:$true] %s50
      %56 = dma.hbm_to_vmem [thread:$0]  %s49, 4096, %s51, [#allocation5], 128, 128, 8
    $region21: #{chinet_forward.1} parent=1 // pred_fallthru
      _
    // Predicated region
    $region22: #{chinet_forward.1} parent=1 // pred_check
      _
    $region23: #{chinet_forward.1} parent=1 // pred_check_branch
      %58 = sbr.rel (0) target = $region25
    $region24: #{chinet_forward.1} parent=1 // pred_region
      _
    $region25: #{chinet_forward.1} parent=1 // pred_fallthru
      _
    // Predicated region
    $region26: #{chinet_forward.1} parent=1 // pred_check
      _
    $region27: #{chinet_forward.1} parent=1 // pred_check_branch
      %60 = sbr.rel (0) target = $region29
    $region28: #{chinet_forward.1} parent=1 // pred_region
      %62 = vsyncadd [#allocation5], 0
      %s63 = sshll.u32 %s6, 4
      %s64 = int_to_ptr.hbm [resolvable:$true] %s63
      %s65 = sshll.u32 [#allocation6], 4
      %s66 = int_to_ptr.vmem [resolvable:$true] %s65
      %71 = dma.hbm_to_vmem [thread:$0]  %s64, 4096, %s66, [#allocation5], 128, 128, 8
    $region29: #{chinet_forward.1} parent=1 // pred_fallthru
      _
    // Predicated region
    $region30: #{chinet_forward.1} parent=1 // pred_check
      _
    $region31: #{chinet_forward.1} parent=1 // pred_check_branch
      %73 = sbr.rel (0) target = $region33
    $region32: #{chinet_forward.1} parent=1 // pred_region
      _
    $region33: #{chinet_forward.1} parent=1 // pred_fallthru
      _
    // Predicated region
    $region34: #{chinet_forward.1} parent=1 // pred_check
      _
    $region35: #{chinet_forward.1} parent=1 // pred_check_branch
      %75 = sbr.rel (0) target = $region37
    $region36: #{chinet_forward.1} parent=1 // pred_region
      %77 = vsyncadd [#allocation8], 0
      %s78 = sshll.u32 %s8, 4
      %s79 = int_to_ptr.hbm [resolvable:$true] %s78
      %s80 = sshll.u32 [#allocation7], 4
      %s81 = int_to_ptr.vmem [resolvable:$true] %s80
      %86 = dma.hbm_to_vmem [thread:$0]  %s79, 4096, %s81, [#allocation8], 128, 128, 8
    $region37: #{chinet_forward.1} parent=1 // pred_fallthru
      _
    // Predicated region
    $region38: #{chinet_forward.1} parent=1 // pred_check
      _
    $region39: #{chinet_forward.1} parent=1 // pred_check_branch
      %88 = sbr.rel (0) target = $region41
    $region40: #{chinet_forward.1} parent=1 // pred_region
      _
    $region41: #{chinet_forward.1} parent=1 // pred_fallthru
      _
    // Predicated region
    $region42: #{chinet_forward.1} parent=1 // pred_check
      _
    $region43: #{chinet_forward.1} parent=1 // pred_check_branch
      %90 = sbr.rel (0) target = $region45
    $region44: #{chinet_forward.1} parent=1 // pred_region
      %92 = vsyncadd [#allocation8], 0
      %s93 = sshll.u32 %s10, 4
      %s94 = int_to_ptr.hbm [resolvable:$true] %s93
      %s95 = sshll.u32 [#allocation9], 4
      %s96 = int_to_ptr.vmem [resolvable:$true] %s95
      %101 = dma.hbm_to_vmem [thread:$0]  %s94, 4096, %s96, [#allocation8], 128, 128, 8
    $region45: #{chinet_forward.1} parent=1 // pred_fallthru
      _
    // Predicated region
    $region46: #{chinet_forward.1} parent=1 // pred_check
      _
    $region47: #{chinet_forward.1} parent=1 // pred_check_branch
      %103 = sbr.rel (0) target = $region49
    $region48: #{chinet_forward.1} parent=1 // pred_region
      _
    $region49: #{chinet_forward.1} parent=1 // pred_fallthru
      _
    // Predicated region
    $region50: #{chinet_forward.1} parent=1 // pred_check
      _
    $region51: #{chinet_forward.1} parent=1 // pred_check_branch
      %105 = sbr.rel (0) target = $region53
    $region52: #{chinet_forward.1} parent=1 // pred_region
      %107 = vsyncadd [#allocation11], 0
      %s108 = sshll.u32 %s12, 4
      %s109 = int_to_ptr.hbm [resolvable:$true] %s108
      %s110 = sshll.u32 [#allocation10], 4
      %s111 = int_to_ptr.vmem [resolvable:$true] %s110
      %116 = dma.hbm_to_vmem [thread:$0]  %s109, 4096, %s111, [#allocation11], 128, 128, 8
    $region53: #{chinet_forward.1} parent=1 // pred_fallthru
      _
    // Predicated region
    $region54: #{chinet_forward.1} parent=1 // pred_check
      _
    $region55: #{chinet_forward.1} parent=1 // pred_check_branch
      %118 = sbr.rel (0) target = $region57
    $region56: #{chinet_forward.1} parent=1 // pred_region
      _
    $region57: #{chinet_forward.1} parent=1 // pred_fallthru
      _
    // Predicated region
    $region58: #{chinet_forward.1} parent=1 // pred_check
      _
    $region59: #{chinet_forward.1} parent=1 // pred_check_branch
      %120 = sbr.rel (0) target = $region61
    $region60: #{chinet_forward.1} parent=1 // pred_region
      %122 = vsyncadd [#allocation11], 0
      %s123 = sshll.u32 %s14, 4
      %s124 = int_to_ptr.hbm [resolvable:$true] %s123
      %s125 = sshll.u32 [#allocation12], 4
      %s126 = int_to_ptr.vmem [resolvable:$true] %s125
      %131 = dma.hbm_to_vmem [thread:$0]  %s124, 2048, %s126, [#allocation11], 64, 64, 4
    $region61: #{chinet_forward.1} parent=1 // pred_fallthru
      _
    // Predicated region
    $region62: #{chinet_forward.1} parent=1 // pred_check
      _
    $region63: #{chinet_forward.1} parent=1 // pred_check_branch
      %133 = sbr.rel (0) target = $region65
    $region64: #{chinet_forward.1} parent=1 // pred_region
      _
    $region65: #{chinet_forward.1} parent=1 // pred_fallthru
      _
    // Predicated region
    $region66: #{chinet_forward.1} parent=1 // pred_check
      _
    $region67: #{chinet_forward.1} parent=1 // pred_check_branch
      %135 = sbr.rel (0) target = $region69
    $region68: #{chinet_forward.1} parent=1 // pred_region
      %137 = dma.done [#allocation3], 2048
    $region69: #{chinet_forward.1} parent=1 // pred_fallthru
      _
    // Predicated region
    $region70: #{chinet_forward.1} parent=1 // pred_check
      _
    $region71: #{chinet_forward.1} parent=1 // pred_check_branch
      %139 = sbr.rel (0) target = $region73
    $region72: #{chinet_forward.1} parent=1 // pred_region
      %141 = dma.done [#allocation5], 4096
    $region73: #{chinet_forward.1} parent=1 // pred_fallthru
      _
    // Predicated region
    $region74: #{chinet_forward.1} parent=1 // pred_check
      _
    $region75: #{chinet_forward.1} parent=1 // pred_check_branch
      %143 = sbr.rel (0) target = $region77
    $region76: #{chinet_forward.1} parent=1 // pred_region
      %145 = dma.done [#allocation5], 4096
    $region77: #{chinet_forward.1} parent=1 // pred_fallthru
      _
    // Predicated region
    $region78: #{chinet_forward.1} parent=1 // pred_check
      _
    $region79: #{chinet_forward.1} parent=1 // pred_check_branch
      %147 = sbr.rel (0) target = $region81
    $region80: #{chinet_forward.1} parent=1 // pred_region
      %149 = dma.done [#allocation8], 4096
    $region81: #{chinet_forward.1} parent=1 // pred_fallthru
      _
    // Predicated region
    $region82: #{chinet_forward.1} parent=1 // pred_check
      _
    $region83: #{chinet_forward.1} parent=1 // pred_check_branch
      %151 = sbr.rel (0) target = $region85
    $region84: #{chinet_forward.1} parent=1 // pred_region
      %153 = dma.done [#allocation8], 4096
    $region85: #{chinet_forward.1} parent=1 // pred_fallthru
      _
    // Predicated region
    $region86: #{chinet_forward.1} parent=1 // pred_check
      _
    $region87: #{chinet_forward.1} parent=1 // pred_check_branch
      %155 = sbr.rel (0) target = $region89
    $region88: #{chinet_forward.1} parent=1 // pred_region
      %157 = dma.done [#allocation11], 4096
    $region89: #{chinet_forward.1} parent=1 // pred_fallthru
      _
    // Predicated region
    $region90: #{chinet_forward.1} parent=1 // pred_check
      _
    $region91: #{chinet_forward.1} parent=1 // pred_check_branch
      %159 = sbr.rel (0) target = $region93
    $region92: #{chinet_forward.1} parent=1 // pred_region
      %161 = dma.done [#allocation11], 2048
    $region93: #{chinet_forward.1} parent=1 // pred_fallthru
      _
    %v162 = vld [vmem:[%s0] sm:$0xf]
    %v163 = vld [vmem:[#allocation2] sm:$0xff]
    %v164 = vld [vmem:[#allocation2 + $0x8] sm:$0xff]
    %v165 = vld [vmem:[#allocation2 + $0x10] sm:$0xff]
    %v166 = vld [vmem:[#allocation2 + $0x18] sm:$0xff]
    %v167 = vld [vmem:[#allocation2 + $0x20] sm:$0xff]
    %v168 = vld [vmem:[#allocation2 + $0x28] sm:$0xff]
    %v169 = vld [vmem:[#allocation2 + $0x30] sm:$0xff]
    %v170 = vld [vmem:[#allocation2 + $0x38] sm:$0xff]
    %v171 = vld [vmem:[#allocation2 + $0x40] sm:$0xff]
    %v172 = vld [vmem:[#allocation2 + $0x48] sm:$0xff]
    %v173 = vld [vmem:[#allocation2 + $0x50] sm:$0xff]
    %v174 = vld [vmem:[#allocation2 + $0x58] sm:$0xff]
    %v175 = vld [vmem:[#allocation2 + $0x60] sm:$0xff]
    %v176 = vld [vmem:[#allocation2 + $0x68] sm:$0xff]
    %v177 = vld [vmem:[#allocation2 + $0x70] sm:$0xff]
    %v178 = vld [vmem:[#allocation2 + $0x78] sm:$0xff]
    %v179 = vld [vmem:[%s3] sm:$0x3]
    %v181 = vperm.slane %v179, 0
    %v182 = vperm.slane %v179, 1
    %v201 = vunpack.c.l.b16 %v163
    %v202 = vunpack.c.h.b16 %v163
    %v203 = vunpack.c.l.b16 %v164
    %v204 = vunpack.c.h.b16 %v164
    %v205 = vunpack.c.l.b16 %v165
    %v206 = vunpack.c.h.b16 %v165
    %v207 = vunpack.c.l.b16 %v166
    %v208 = vunpack.c.h.b16 %v166
    %v209 = vunpack.c.l.b16 %v167
    %v210 = vunpack.c.h.b16 %v167
    %v211 = vunpack.c.l.b16 %v168
    %v212 = vunpack.c.h.b16 %v168
    %v213 = vunpack.c.l.b16 %v169
    %v214 = vunpack.c.h.b16 %v169
    %v215 = vunpack.c.l.b16 %v170
    %v216 = vunpack.c.h.b16 %v170
    %v217 = vunpack.c.l.b16 %v171
    %v218 = vunpack.c.h.b16 %v171
    %v219 = vunpack.c.l.b16 %v172
    %v220 = vunpack.c.h.b16 %v172
    %v221 = vunpack.c.l.b16 %v173
    %v222 = vunpack.c.h.b16 %v173
    %v223 = vunpack.c.l.b16 %v174
    %v224 = vunpack.c.h.b16 %v174
    %v225 = vunpack.c.l.b16 %v175
    %v226 = vunpack.c.h.b16 %v175
    %v227 = vunpack.c.l.b16 %v176
    %v228 = vunpack.c.h.b16 %v176
    %v229 = vunpack.c.l.b16 %v177
    %v230 = vunpack.c.h.b16 %v177
    %v231 = vunpack.c.l.b16 %v178
    %v232 = vunpack.c.h.b16 %v178
    %v233 = vpack.c.b16 %v203, %v201
    %v234 = vpack.c.b16 %v204, %v202
    %v235 = vpack.c.b16 %v207, %v205
    %v236 = vpack.c.b16 %v208, %v206
    %v237 = vpack.c.b16 %v211, %v209
    %v238 = vpack.c.b16 %v212, %v210
    %v239 = vpack.c.b16 %v215, %v213
    %v240 = vpack.c.b16 %v216, %v214
    %v241 = vpack.c.b16 %v219, %v217
    %v242 = vpack.c.b16 %v220, %v218
    %v243 = vpack.c.b16 %v223, %v221
    %v244 = vpack.c.b16 %v224, %v222
    %v245 = vpack.c.b16 %v227, %v225
    %v246 = vpack.c.b16 %v228, %v226
    %v247 = vpack.c.b16 %v231, %v229
    %v248 = vpack.c.b16 %v232, %v230
    %265 = vmatpush.bf16.msra.mxu0 %v247
    %266 = vmatpush.bf16.msra.mxu0 %v245
    %267 = vmatpush.bf16.msra.mxu0 %v243
    %268 = vmatpush.bf16.msra.mxu0 %v241
    %269 = vmatpush.bf16.msra.mxu0 %v239
    %270 = vmatpush.bf16.msra.mxu0 %v237
    %271 = vmatpush.bf16.msra.mxu0 %v235
    %272 = vmatpush.bf16.msra.mxu0 %v233
    %273 = vmatmul.bf16.gmra.mxu0 %v162
    %v274 = vpop.f32.mrf.mxu0
    %v275 = vadd.f32 %v181, %v274
    %v276 = vpop.f32.mrf.mxu0
    %277 = vdwg.mxu0
    %278 = vmatpush.bf16.msra.mxu0 %v248
    %279 = vmatpush.bf16.msra.mxu0 %v246
    %280 = vmatpush.bf16.msra.mxu0 %v244
    %281 = vmatpush.bf16.msra.mxu0 %v242
    %282 = vmatpush.bf16.msra.mxu0 %v240
    %283 = vmatpush.bf16.msra.mxu0 %v238
    %284 = vmatpush.bf16.msra.mxu0 %v236
    %285 = vmatpush.bf16.msra.mxu0 %v234
    %286 = vmatmul.bf16.gmra.mxu0 %v162
    %v287 = vpop.f32.mrf.mxu0
    %v288 = vadd.f32 %v182, %v287
    %v289 = vpop.f32.mrf.mxu0
    %290 = vdwg.mxu0
    %v291 = vmax.f32 %v275, 0.0
    %v292 = vmax.f32 %v288, 0.0
    %v293 = vpack.c.bf16 %v291, %v291
    %v294 = vpack.c.bf16 %v292, %v292
    %v295 = vld [vmem:[#allocation4] sm:$0xff]
    %v296 = vld [vmem:[#allocation4 + $0x8] sm:$0xff]
    %v297 = vld [vmem:[#allocation4 + $0x10] sm:$0xff]
    %v298 = vld [vmem:[#allocation4 + $0x18] sm:$0xff]
    %v299 = vld [vmem:[#allocation4 + $0x20] sm:$0xff]
    %v300 = vld [vmem:[#allocation4 + $0x28] sm:$0xff]
    %v301 = vld [vmem:[#allocation4 + $0x30] sm:$0xff]
    %v302 = vld [vmem:[#allocation4 + $0x38] sm:$0xff]
    %v303 = vld [vmem:[#allocation4 + $0x40] sm:$0xff]
    %v304 = vld [vmem:[#allocation4 + $0x48] sm:$0xff]
    %v305 = vld [vmem:[#allocation4 + $0x50] sm:$0xff]
    %v306 = vld [vmem:[#allocation4 + $0x58] sm:$0xff]
    %v307 = vld [vmem:[#allocation4 + $0x60] sm:$0xff]
    %v308 = vld [vmem:[#allocation4 + $0x68] sm:$0xff]
    %v309 = vld [vmem:[#allocation4 + $0x70] sm:$0xff]
    %v310 = vld [vmem:[#allocation4 + $0x78] sm:$0xff]
    %v311 = vld [vmem:[#allocation4 + $0x80] sm:$0xff]
    %v312 = vld [vmem:[#allocation4 + $0x88] sm:$0xff]
    %v313 = vld [vmem:[#allocation4 + $0x90] sm:$0xff]
    %v314 = vld [vmem:[#allocation4 + $0x98] sm:$0xff]
    %v315 = vld [vmem:[#allocation4 + $0xa0] sm:$0xff]
    %v316 = vld [vmem:[#allocation4 + $0xa8] sm:$0xff]
    %v317 = vld [vmem:[#allocation4 + $0xb0] sm:$0xff]
    %v318 = vld [vmem:[#allocation4 + $0xb8] sm:$0xff]
    %v319 = vld [vmem:[#allocation4 + $0xc0] sm:$0xff]
    %v320 = vld [vmem:[#allocation4 + $0xc8] sm:$0xff]
    %v321 = vld [vmem:[#allocation4 + $0xd0] sm:$0xff]
    %v322 = vld [vmem:[#allocation4 + $0xd8] sm:$0xff]
    %v323 = vld [vmem:[#allocation4 + $0xe0] sm:$0xff]
    %v324 = vld [vmem:[#allocation4 + $0xe8] sm:$0xff]
    %v325 = vld [vmem:[#allocation4 + $0xf0] sm:$0xff]
    %v326 = vld [vmem:[#allocation4 + $0xf8] sm:$0xff]
    %v327 = vld [vmem:[%s5] sm:$0x3]
    %v329 = vperm.slane %v327, 0
    %v330 = vperm.slane %v327, 1
    %v365 = vunpack.c.l.b16 %v295
    %v366 = vunpack.c.h.b16 %v295
    %v367 = vunpack.c.l.b16 %v296
    %v368 = vunpack.c.h.b16 %v296
    %v369 = vunpack.c.l.b16 %v297
    %v370 = vunpack.c.h.b16 %v297
    %v371 = vunpack.c.l.b16 %v298
    %v372 = vunpack.c.h.b16 %v298
    %v373 = vunpack.c.l.b16 %v299
    %v374 = vunpack.c.h.b16 %v299
    %v375 = vunpack.c.l.b16 %v300
    %v376 = vunpack.c.h.b16 %v300
    %v377 = vunpack.c.l.b16 %v301
    %v378 = vunpack.c.h.b16 %v301
    %v379 = vunpack.c.l.b16 %v302
    %v380 = vunpack.c.h.b16 %v302
    %v381 = vunpack.c.l.b16 %v303
    %v382 = vunpack.c.h.b16 %v303
    %v383 = vunpack.c.l.b16 %v304
    %v384 = vunpack.c.h.b16 %v304
    %v385 = vunpack.c.l.b16 %v305
    %v386 = vunpack.c.h.b16 %v305
    %v387 = vunpack.c.l.b16 %v306
    %v388 = vunpack.c.h.b16 %v306
    %v389 = vunpack.c.l.b16 %v307
    %v390 = vunpack.c.h.b16 %v307
    %v391 = vunpack.c.l.b16 %v308
    %v392 = vunpack.c.h.b16 %v308
    %v393 = vunpack.c.l.b16 %v309
    %v394 = vunpack.c.h.b16 %v309
    %v395 = vunpack.c.l.b16 %v310
    %v396 = vunpack.c.h.b16 %v310
    %v397 = vunpack.c.l.b16 %v311
    %v398 = vunpack.c.h.b16 %v311
    %v399 = vunpack.c.l.b16 %v312
    %v400 = vunpack.c.h.b16 %v312
    %v401 = vunpack.c.l.b16 %v313
    %v402 = vunpack.c.h.b16 %v313
    %v403 = vunpack.c.l.b16 %v314
    %v404 = vunpack.c.h.b16 %v314
    %v405 = vunpack.c.l.b16 %v315
    %v406 = vunpack.c.h.b16 %v315
    %v407 = vunpack.c.l.b16 %v316
    %v408 = vunpack.c.h.b16 %v316
    %v409 = vunpack.c.l.b16 %v317
    %v410 = vunpack.c.h.b16 %v317
    %v411 = vunpack.c.l.b16 %v318
    %v412 = vunpack.c.h.b16 %v318
    %v413 = vunpack.c.l.b16 %v319
    %v414 = vunpack.c.h.b16 %v319
    %v415 = vunpack.c.l.b16 %v320
    %v416 = vunpack.c.h.b16 %v320
    %v417 = vunpack.c.l.b16 %v321
    %v418 = vunpack.c.h.b16 %v321
    %v419 = vunpack.c.l.b16 %v322
    %v420 = vunpack.c.h.b16 %v322
    %v421 = vunpack.c.l.b16 %v323
    %v422 = vunpack.c.h.b16 %v323
    %v423 = vunpack.c.l.b16 %v324
    %v424 = vunpack.c.h.b16 %v324
    %v425 = vunpack.c.l.b16 %v325
    %v426 = vunpack.c.h.b16 %v325
    %v427 = vunpack.c.l.b16 %v326
    %v428 = vunpack.c.h.b16 %v326
    %v429 = vpack.c.b16 %v367, %v365
    %v430 = vpack.c.b16 %v368, %v366
    %v431 = vpack.c.b16 %v371, %v369
    %v432 = vpack.c.b16 %v372, %v370
    %v433 = vpack.c.b16 %v375, %v373
    %v434 = vpack.c.b16 %v376, %v374
    %v435 = vpack.c.b16 %v379, %v377
    %v436 = vpack.c.b16 %v380, %v378
    %v437 = vpack.c.b16 %v383, %v381
    %v438 = vpack.c.b16 %v384, %v382
    %v439 = vpack.c.b16 %v387, %v385
    %v440 = vpack.c.b16 %v388, %v386
    %v441 = vpack.c.b16 %v391, %v389
    %v442 = vpack.c.b16 %v392, %v390
    %v443 = vpack.c.b16 %v395, %v393
    %v444 = vpack.c.b16 %v396, %v394
    %v445 = vpack.c.b16 %v399, %v397
    %v446 = vpack.c.b16 %v400, %v398
    %v447 = vpack.c.b16 %v403, %v401
    %v448 = vpack.c.b16 %v404, %v402
    %v449 = vpack.c.b16 %v407, %v405
    %v450 = vpack.c.b16 %v408, %v406
    %v451 = vpack.c.b16 %v411, %v409
    %v452 = vpack.c.b16 %v412, %v410
    %v453 = vpack.c.b16 %v415, %v413
    %v454 = vpack.c.b16 %v416, %v414
    %v455 = vpack.c.b16 %v419, %v417
    %v456 = vpack.c.b16 %v420, %v418
    %v457 = vpack.c.b16 %v423, %v421
    %v458 = vpack.c.b16 %v424, %v422
    %v459 = vpack.c.b16 %v427, %v425
    %v460 = vpack.c.b16 %v428, %v426
    %493 = vmatpush.bf16.msra.mxu0 %v443
    %494 = vmatpush.bf16.msra.mxu0 %v441
    %495 = vmatpush.bf16.msra.mxu0 %v439
    %496 = vmatpush.bf16.msra.mxu0 %v437
    %497 = vmatpush.bf16.msra.mxu0 %v435
    %498 = vmatpush.bf16.msra.mxu0 %v433
    %499 = vmatpush.bf16.msra.mxu0 %v431
    %500 = vmatpush.bf16.msra.mxu0 %v429
    %501 = vmatmul.bf16.gmra.mxu0 %v293
    %v502 = vpop.f32.mrf.mxu0
    %v503 = vadd.f32 %v329, %v502
    %v504 = vpop.f32.mrf.mxu0
    %505 = vdwg.mxu0
    %506 = vmatpush.bf16.msra.mxu0 %v459
    %507 = vmatpush.bf16.msra.mxu0 %v457
    %508 = vmatpush.bf16.msra.mxu0 %v455
    %509 = vmatpush.bf16.msra.mxu0 %v453
    %510 = vmatpush.bf16.msra.mxu0 %v451
    %511 = vmatpush.bf16.msra.mxu0 %v449
    %512 = vmatpush.bf16.msra.mxu0 %v447
    %513 = vmatpush.bf16.msra.mxu0 %v445
    %514 = vmatmul.bf16.gmra.mxu0 %v294
    %v515 = vpop.f32.mrf.mxu0
    %v516 = vadd.f32 %v503, %v515
    %v517 = vpop.f32.mrf.mxu0
    %518 = vdwg.mxu0
    %519 = vmatpush.bf16.msra.mxu0 %v444
    %520 = vmatpush.bf16.msra.mxu0 %v442
    %521 = vmatpush.bf16.msra.mxu0 %v440
    %522 = vmatpush.bf16.msra.mxu0 %v438
    %523 = vmatpush.bf16.msra.mxu0 %v436
    %524 = vmatpush.bf16.msra.mxu0 %v434
    %525 = vmatpush.bf16.msra.mxu0 %v432
    %526 = vmatpush.bf16.msra.mxu0 %v430
    %527 = vmatmul.bf16.gmra.mxu0 %v293
    %v528 = vpop.f32.mrf.mxu0
    %v529 = vadd.f32 %v330, %v528
    %v530 = vpop.f32.mrf.mxu0
    %531 = vdwg.mxu0
    %532 = vmatpush.bf16.msra.mxu0 %v460
    %533 = vmatpush.bf16.msra.mxu0 %v458
    %534 = vmatpush.bf16.msra.mxu0 %v456
    %535 = vmatpush.bf16.msra.mxu0 %v454
    %536 = vmatpush.bf16.msra.mxu0 %v452
    %537 = vmatpush.bf16.msra.mxu0 %v450
    %538 = vmatpush.bf16.msra.mxu0 %v448
    %539 = vmatpush.bf16.msra.mxu0 %v446
    %540 = vmatmul.bf16.gmra.mxu0 %v294
    %v541 = vpop.f32.mrf.mxu0
    %v542 = vadd.f32 %v529, %v541
    %v543 = vpop.f32.mrf.mxu0
    %544 = vdwg.mxu0
    %v545 = vmax.f32 %v516, 0.0
    %v546 = vmax.f32 %v542, 0.0
    %v547 = vpack.c.bf16 %v545, %v545
    %v548 = vpack.c.bf16 %v546, %v546
    %v549 = vld [vmem:[#allocation6] sm:$0xff]
    %v550 = vld [vmem:[#allocation6 + $0x8] sm:$0xff]
    %v551 = vld [vmem:[#allocation6 + $0x10] sm:$0xff]
    %v552 = vld [vmem:[#allocation6 + $0x18] sm:$0xff]
    %v553 = vld [vmem:[#allocation6 + $0x20] sm:$0xff]
    %v554 = vld [vmem:[#allocation6 + $0x28] sm:$0xff]
    %v555 = vld [vmem:[#allocation6 + $0x30] sm:$0xff]
    %v556 = vld [vmem:[#allocation6 + $0x38] sm:$0xff]
    %v557 = vld [vmem:[#allocation6 + $0x40] sm:$0xff]
    %v558 = vld [vmem:[#allocation6 + $0x48] sm:$0xff]
    %v559 = vld [vmem:[#allocation6 + $0x50] sm:$0xff]
    %v560 = vld [vmem:[#allocation6 + $0x58] sm:$0xff]
    %v561 = vld [vmem:[#allocation6 + $0x60] sm:$0xff]
    %v562 = vld [vmem:[#allocation6 + $0x68] sm:$0xff]
    %v563 = vld [vmem:[#allocation6 + $0x70] sm:$0xff]
    %v564 = vld [vmem:[#allocation6 + $0x78] sm:$0xff]
    %v565 = vld [vmem:[#allocation6 + $0x80] sm:$0xff]
    %v566 = vld [vmem:[#allocation6 + $0x88] sm:$0xff]
    %v567 = vld [vmem:[#allocation6 + $0x90] sm:$0xff]
    %v568 = vld [vmem:[#allocation6 + $0x98] sm:$0xff]
    %v569 = vld [vmem:[#allocation6 + $0xa0] sm:$0xff]
    %v570 = vld [vmem:[#allocation6 + $0xa8] sm:$0xff]
    %v571 = vld [vmem:[#allocation6 + $0xb0] sm:$0xff]
    %v572 = vld [vmem:[#allocation6 + $0xb8] sm:$0xff]
    %v573 = vld [vmem:[#allocation6 + $0xc0] sm:$0xff]
    %v574 = vld [vmem:[#allocation6 + $0xc8] sm:$0xff]
    %v575 = vld [vmem:[#allocation6 + $0xd0] sm:$0xff]
    %v576 = vld [vmem:[#allocation6 + $0xd8] sm:$0xff]
    %v577 = vld [vmem:[#allocation6 + $0xe0] sm:$0xff]
    %v578 = vld [vmem:[#allocation6 + $0xe8] sm:$0xff]
    %v579 = vld [vmem:[#allocation6 + $0xf0] sm:$0xff]
    %v580 = vld [vmem:[#allocation6 + $0xf8] sm:$0xff]
    %v581 = vld [vmem:[%s7] sm:$0x3]
    %v583 = vperm.slane %v581, 0
    %v584 = vperm.slane %v581, 1
    %v619 = vunpack.c.l.b16 %v549
    %v620 = vunpack.c.h.b16 %v549
    %v621 = vunpack.c.l.b16 %v550
    %v622 = vunpack.c.h.b16 %v550
    %v623 = vunpack.c.l.b16 %v551
    %v624 = vunpack.c.h.b16 %v551
    %v625 = vunpack.c.l.b16 %v552
    %v626 = vunpack.c.h.b16 %v552
    %v627 = vunpack.c.l.b16 %v553
    %v628 = vunpack.c.h.b16 %v553
    %v629 = vunpack.c.l.b16 %v554
    %v630 = vunpack.c.h.b16 %v554
    %v631 = vunpack.c.l.b16 %v555
    %v632 = vunpack.c.h.b16 %v555
    %v633 = vunpack.c.l.b16 %v556
    %v634 = vunpack.c.h.b16 %v556
    %v635 = vunpack.c.l.b16 %v557
    %v636 = vunpack.c.h.b16 %v557
    %v637 = vunpack.c.l.b16 %v558
    %v638 = vunpack.c.h.b16 %v558
    %v639 = vunpack.c.l.b16 %v559
    %v640 = vunpack.c.h.b16 %v559
    %v641 = vunpack.c.l.b16 %v560
    %v642 = vunpack.c.h.b16 %v560
    %v643 = vunpack.c.l.b16 %v561
    %v644 = vunpack.c.h.b16 %v561
    %v645 = vunpack.c.l.b16 %v562
    %v646 = vunpack.c.h.b16 %v562
    %v647 = vunpack.c.l.b16 %v563
    %v648 = vunpack.c.h.b16 %v563
    %v649 = vunpack.c.l.b16 %v564
    %v650 = vunpack.c.h.b16 %v564
    %v651 = vunpack.c.l.b16 %v565
    %v652 = vunpack.c.h.b16 %v565
    %v653 = vunpack.c.l.b16 %v566
    %v654 = vunpack.c.h.b16 %v566
    %v655 = vunpack.c.l.b16 %v567
    %v656 = vunpack.c.h.b16 %v567
    %v657 = vunpack.c.l.b16 %v568
    %v658 = vunpack.c.h.b16 %v568
    %v659 = vunpack.c.l.b16 %v569
    %v660 = vunpack.c.h.b16 %v569
    %v661 = vunpack.c.l.b16 %v570
    %v662 = vunpack.c.h.b16 %v570
    %v663 = vunpack.c.l.b16 %v571
    %v664 = vunpack.c.h.b16 %v571
    %v665 = vunpack.c.l.b16 %v572
    %v666 = vunpack.c.h.b16 %v572
    %v667 = vunpack.c.l.b16 %v573
    %v668 = vunpack.c.h.b16 %v573
    %v669 = vunpack.c.l.b16 %v574
    %v670 = vunpack.c.h.b16 %v574
    %v671 = vunpack.c.l.b16 %v575
    %v672 = vunpack.c.h.b16 %v575
    %v673 = vunpack.c.l.b16 %v576
    %v674 = vunpack.c.h.b16 %v576
    %v675 = vunpack.c.l.b16 %v577
    %v676 = vunpack.c.h.b16 %v577
    %v677 = vunpack.c.l.b16 %v578
    %v678 = vunpack.c.h.b16 %v578
    %v679 = vunpack.c.l.b16 %v579
    %v680 = vunpack.c.h.b16 %v579
    %v681 = vunpack.c.l.b16 %v580
    %v682 = vunpack.c.h.b16 %v580
    %v683 = vpack.c.b16 %v621, %v619
    %v684 = vpack.c.b16 %v622, %v620
    %v685 = vpack.c.b16 %v625, %v623
    %v686 = vpack.c.b16 %v626, %v624
    %v687 = vpack.c.b16 %v629, %v627
    %v688 = vpack.c.b16 %v630, %v628
    %v689 = vpack.c.b16 %v633, %v631
    %v690 = vpack.c.b16 %v634, %v632
    %v691 = vpack.c.b16 %v637, %v635
    %v692 = vpack.c.b16 %v638, %v636
    %v693 = vpack.c.b16 %v641, %v639
    %v694 = vpack.c.b16 %v642, %v640
    %v695 = vpack.c.b16 %v645, %v643
    %v696 = vpack.c.b16 %v646, %v644
    %v697 = vpack.c.b16 %v649, %v647
    %v698 = vpack.c.b16 %v650, %v648
    %v699 = vpack.c.b16 %v653, %v651
    %v700 = vpack.c.b16 %v654, %v652
    %v701 = vpack.c.b16 %v657, %v655
    %v702 = vpack.c.b16 %v658, %v656
    %v703 = vpack.c.b16 %v661, %v659
    %v704 = vpack.c.b16 %v662, %v660
    %v705 = vpack.c.b16 %v665, %v663
    %v706 = vpack.c.b16 %v666, %v664
    %v707 = vpack.c.b16 %v669, %v667
    %v708 = vpack.c.b16 %v670, %v668
    %v709 = vpack.c.b16 %v673, %v671
    %v710 = vpack.c.b16 %v674, %v672
    %v711 = vpack.c.b16 %v677, %v675
    %v712 = vpack.c.b16 %v678, %v676
    %v713 = vpack.c.b16 %v681, %v679
    %v714 = vpack.c.b16 %v682, %v680
    %747 = vmatpush.bf16.msra.mxu0 %v697
    %748 = vmatpush.bf16.msra.mxu0 %v695
    %749 = vmatpush.bf16.msra.mxu0 %v693
    %750 = vmatpush.bf16.msra.mxu0 %v691
    %751 = vmatpush.bf16.msra.mxu0 %v689
    %752 = vmatpush.bf16.msra.mxu0 %v687
    %753 = vmatpush.bf16.msra.mxu0 %v685
    %754 = vmatpush.bf16.msra.mxu0 %v683
    %755 = vmatmul.bf16.gmra.mxu0 %v547
    %v756 = vpop.f32.mrf.mxu0
    %v757 = vadd.f32 %v583, %v756
    %v758 = vpop.f32.mrf.mxu0
    %759 = vdwg.mxu0
    %760 = vmatpush.bf16.msra.mxu0 %v713
    %761 = vmatpush.bf16.msra.mxu0 %v711
    %762 = vmatpush.bf16.msra.mxu0 %v709
    %763 = vmatpush.bf16.msra.mxu0 %v707
    %764 = vmatpush.bf16.msra.mxu0 %v705
    %765 = vmatpush.bf16.msra.mxu0 %v703
    %766 = vmatpush.bf16.msra.mxu0 %v701
    %767 = vmatpush.bf16.msra.mxu0 %v699
    %768 = vmatmul.bf16.gmra.mxu0 %v548
    %v769 = vpop.f32.mrf.mxu0
    %v770 = vadd.f32 %v757, %v769
    %v771 = vpop.f32.mrf.mxu0
    %772 = vdwg.mxu0
    %773 = vmatpush.bf16.msra.mxu0 %v698
    %774 = vmatpush.bf16.msra.mxu0 %v696
    %775 = vmatpush.bf16.msra.mxu0 %v694
    %776 = vmatpush.bf16.msra.mxu0 %v692
    %777 = vmatpush.bf16.msra.mxu0 %v690
    %778 = vmatpush.bf16.msra.mxu0 %v688
    %779 = vmatpush.bf16.msra.mxu0 %v686
    %780 = vmatpush.bf16.msra.mxu0 %v684
    %781 = vmatmul.bf16.gmra.mxu0 %v547
    %v782 = vpop.f32.mrf.mxu0
    %v783 = vadd.f32 %v584, %v782
    %v784 = vpop.f32.mrf.mxu0
    %785 = vdwg.mxu0
    %786 = vmatpush.bf16.msra.mxu0 %v714
    %787 = vmatpush.bf16.msra.mxu0 %v712
    %788 = vmatpush.bf16.msra.mxu0 %v710
    %789 = vmatpush.bf16.msra.mxu0 %v708
    %790 = vmatpush.bf16.msra.mxu0 %v706
    %791 = vmatpush.bf16.msra.mxu0 %v704
    %792 = vmatpush.bf16.msra.mxu0 %v702
    %793 = vmatpush.bf16.msra.mxu0 %v700
    %794 = vmatmul.bf16.gmra.mxu0 %v548
    %v795 = vpop.f32.mrf.mxu0
    %v796 = vadd.f32 %v783, %v795
    %v797 = vpop.f32.mrf.mxu0
    %798 = vdwg.mxu0
    %v799 = vmax.f32 %v770, 0.0
    %v800 = vmax.f32 %v796, 0.0
    %v801 = vpack.c.bf16 %v799, %v799
    %v802 = vpack.c.bf16 %v800, %v800
    %v803 = vld [vmem:[#allocation7] sm:$0xff]
    %v804 = vld [vmem:[#allocation7 + $0x8] sm:$0xff]
    %v805 = vld [vmem:[#allocation7 + $0x10] sm:$0xff]
    %v806 = vld [vmem:[#allocation7 + $0x18] sm:$0xff]
    %v807 = vld [vmem:[#allocation7 + $0x20] sm:$0xff]
    %v808 = vld [vmem:[#allocation7 + $0x28] sm:$0xff]
    %v809 = vld [vmem:[#allocation7 + $0x30] sm:$0xff]
    %v810 = vld [vmem:[#allocation7 + $0x38] sm:$0xff]
    %v811 = vld [vmem:[#allocation7 + $0x40] sm:$0xff]
    %v812 = vld [vmem:[#allocation7 + $0x48] sm:$0xff]
    %v813 = vld [vmem:[#allocation7 + $0x50] sm:$0xff]
    %v814 = vld [vmem:[#allocation7 + $0x58] sm:$0xff]
    %v815 = vld [vmem:[#allocation7 + $0x60] sm:$0xff]
    %v816 = vld [vmem:[#allocation7 + $0x68] sm:$0xff]
    %v817 = vld [vmem:[#allocation7 + $0x70] sm:$0xff]
    %v818 = vld [vmem:[#allocation7 + $0x78] sm:$0xff]
    %v819 = vld [vmem:[#allocation7 + $0x80] sm:$0xff]
    %v820 = vld [vmem:[#allocation7 + $0x88] sm:$0xff]
    %v821 = vld [vmem:[#allocation7 + $0x90] sm:$0xff]
    %v822 = vld [vmem:[#allocation7 + $0x98] sm:$0xff]
    %v823 = vld [vmem:[#allocation7 + $0xa0] sm:$0xff]
    %v824 = vld [vmem:[#allocation7 + $0xa8] sm:$0xff]
    %v825 = vld [vmem:[#allocation7 + $0xb0] sm:$0xff]
    %v826 = vld [vmem:[#allocation7 + $0xb8] sm:$0xff]
    %v827 = vld [vmem:[#allocation7 + $0xc0] sm:$0xff]
    %v828 = vld [vmem:[#allocation7 + $0xc8] sm:$0xff]
    %v829 = vld [vmem:[#allocation7 + $0xd0] sm:$0xff]
    %v830 = vld [vmem:[#allocation7 + $0xd8] sm:$0xff]
    %v831 = vld [vmem:[#allocation7 + $0xe0] sm:$0xff]
    %v832 = vld [vmem:[#allocation7 + $0xe8] sm:$0xff]
    %v833 = vld [vmem:[#allocation7 + $0xf0] sm:$0xff]
    %v834 = vld [vmem:[#allocation7 + $0xf8] sm:$0xff]
    %v835 = vld [vmem:[%s9] sm:$0x3]
    %v837 = vperm.slane %v835, 0
    %v838 = vperm.slane %v835, 1
    %v873 = vunpack.c.l.b16 %v803
    %v874 = vunpack.c.h.b16 %v803
    %v875 = vunpack.c.l.b16 %v804
    %v876 = vunpack.c.h.b16 %v804
    %v877 = vunpack.c.l.b16 %v805
    %v878 = vunpack.c.h.b16 %v805
    %v879 = vunpack.c.l.b16 %v806
    %v880 = vunpack.c.h.b16 %v806
    %v881 = vunpack.c.l.b16 %v807
    %v882 = vunpack.c.h.b16 %v807
    %v883 = vunpack.c.l.b16 %v808
    %v884 = vunpack.c.h.b16 %v808
    %v885 = vunpack.c.l.b16 %v809
    %v886 = vunpack.c.h.b16 %v809
    %v887 = vunpack.c.l.b16 %v810
    %v888 = vunpack.c.h.b16 %v810
    %v889 = vunpack.c.l.b16 %v811
    %v890 = vunpack.c.h.b16 %v811
    %v891 = vunpack.c.l.b16 %v812
    %v892 = vunpack.c.h.b16 %v812
    %v893 = vunpack.c.l.b16 %v813
    %v894 = vunpack.c.h.b16 %v813
    %v895 = vunpack.c.l.b16 %v814
    %v896 = vunpack.c.h.b16 %v814
    %v897 = vunpack.c.l.b16 %v815
    %v898 = vunpack.c.h.b16 %v815
    %v899 = vunpack.c.l.b16 %v816
    %v900 = vunpack.c.h.b16 %v816
    %v901 = vunpack.c.l.b16 %v817
    %v902 = vunpack.c.h.b16 %v817
    %v903 = vunpack.c.l.b16 %v818
    %v904 = vunpack.c.h.b16 %v818
    %v905 = vunpack.c.l.b16 %v819
    %v906 = vunpack.c.h.b16 %v819
    %v907 = vunpack.c.l.b16 %v820
    %v908 = vunpack.c.h.b16 %v820
    %v909 = vunpack.c.l.b16 %v821
    %v910 = vunpack.c.h.b16 %v821
    %v911 = vunpack.c.l.b16 %v822
    %v912 = vunpack.c.h.b16 %v822
    %v913 = vunpack.c.l.b16 %v823
    %v914 = vunpack.c.h.b16 %v823
    %v915 = vunpack.c.l.b16 %v824
    %v916 = vunpack.c.h.b16 %v824
    %v917 = vunpack.c.l.b16 %v825
    %v918 = vunpack.c.h.b16 %v825
    %v919 = vunpack.c.l.b16 %v826
    %v920 = vunpack.c.h.b16 %v826
    %v921 = vunpack.c.l.b16 %v827
    %v922 = vunpack.c.h.b16 %v827
    %v923 = vunpack.c.l.b16 %v828
    %v924 = vunpack.c.h.b16 %v828
    %v925 = vunpack.c.l.b16 %v829
    %v926 = vunpack.c.h.b16 %v829
    %v927 = vunpack.c.l.b16 %v830
    %v928 = vunpack.c.h.b16 %v830
    %v929 = vunpack.c.l.b16 %v831
    %v930 = vunpack.c.h.b16 %v831
    %v931 = vunpack.c.l.b16 %v832
    %v932 = vunpack.c.h.b16 %v832
    %v933 = vunpack.c.l.b16 %v833
    %v934 = vunpack.c.h.b16 %v833
    %v935 = vunpack.c.l.b16 %v834
    %v936 = vunpack.c.h.b16 %v834
    %v937 = vpack.c.b16 %v875, %v873
    %v938 = vpack.c.b16 %v876, %v874
    %v939 = vpack.c.b16 %v879, %v877
    %v940 = vpack.c.b16 %v880, %v878
    %v941 = vpack.c.b16 %v883, %v881
    %v942 = vpack.c.b16 %v884, %v882
    %v943 = vpack.c.b16 %v887, %v885
    %v944 = vpack.c.b16 %v888, %v886
    %v945 = vpack.c.b16 %v891, %v889
    %v946 = vpack.c.b16 %v892, %v890
    %v947 = vpack.c.b16 %v895, %v893
    %v948 = vpack.c.b16 %v896, %v894
    %v949 = vpack.c.b16 %v899, %v897
    %v950 = vpack.c.b16 %v900, %v898
    %v951 = vpack.c.b16 %v903, %v901
    %v952 = vpack.c.b16 %v904, %v902
    %v953 = vpack.c.b16 %v907, %v905
    %v954 = vpack.c.b16 %v908, %v906
    %v955 = vpack.c.b16 %v911, %v909
    %v956 = vpack.c.b16 %v912, %v910
    %v957 = vpack.c.b16 %v915, %v913
    %v958 = vpack.c.b16 %v916, %v914
    %v959 = vpack.c.b16 %v919, %v917
    %v960 = vpack.c.b16 %v920, %v918
    %v961 = vpack.c.b16 %v923, %v921
    %v962 = vpack.c.b16 %v924, %v922
    %v963 = vpack.c.b16 %v927, %v925
    %v964 = vpack.c.b16 %v928, %v926
    %v965 = vpack.c.b16 %v931, %v929
    %v966 = vpack.c.b16 %v932, %v930
    %v967 = vpack.c.b16 %v935, %v933
    %v968 = vpack.c.b16 %v936, %v934
    %1001 = vmatpush.bf16.msra.mxu0 %v951
    %1002 = vmatpush.bf16.msra.mxu0 %v949
    %1003 = vmatpush.bf16.msra.mxu0 %v947
    %1004 = vmatpush.bf16.msra.mxu0 %v945
    %1005 = vmatpush.bf16.msra.mxu0 %v943
    %1006 = vmatpush.bf16.msra.mxu0 %v941
    %1007 = vmatpush.bf16.msra.mxu0 %v939
    %1008 = vmatpush.bf16.msra.mxu0 %v937
    %1009 = vmatmul.bf16.gmra.mxu0 %v801
    %v1010 = vpop.f32.mrf.mxu0
    %v1011 = vadd.f32 %v837, %v1010
    %v1012 = vpop.f32.mrf.mxu0
    %1013 = vdwg.mxu0
    %1014 = vmatpush.bf16.msra.mxu0 %v967
    %1015 = vmatpush.bf16.msra.mxu0 %v965
    %1016 = vmatpush.bf16.msra.mxu0 %v963
    %1017 = vmatpush.bf16.msra.mxu0 %v961
    %1018 = vmatpush.bf16.msra.mxu0 %v959
    %1019 = vmatpush.bf16.msra.mxu0 %v957
    %1020 = vmatpush.bf16.msra.mxu0 %v955
    %1021 = vmatpush.bf16.msra.mxu0 %v953
    %1022 = vmatmul.bf16.gmra.mxu0 %v802
    %v1023 = vpop.f32.mrf.mxu0
    %v1024 = vadd.f32 %v1011, %v1023
    %v1025 = vpop.f32.mrf.mxu0
    %1026 = vdwg.mxu0
    %1027 = vmatpush.bf16.msra.mxu0 %v952
    %1028 = vmatpush.bf16.msra.mxu0 %v950
    %1029 = vmatpush.bf16.msra.mxu0 %v948
    %1030 = vmatpush.bf16.msra.mxu0 %v946
    %1031 = vmatpush.bf16.msra.mxu0 %v944
    %1032 = vmatpush.bf16.msra.mxu0 %v942
    %1033 = vmatpush.bf16.msra.mxu0 %v940
    %1034 = vmatpush.bf16.msra.mxu0 %v938
    %1035 = vmatmul.bf16.gmra.mxu0 %v801
    %v1036 = vpop.f32.mrf.mxu0
    %v1037 = vadd.f32 %v838, %v1036
    %v1038 = vpop.f32.mrf.mxu0
    %1039 = vdwg.mxu0
    %1040 = vmatpush.bf16.msra.mxu0 %v968
    %1041 = vmatpush.bf16.msra.mxu0 %v966
    %1042 = vmatpush.bf16.msra.mxu0 %v964
    %1043 = vmatpush.bf16.msra.mxu0 %v962
    %1044 = vmatpush.bf16.msra.mxu0 %v960
    %1045 = vmatpush.bf16.msra.mxu0 %v958
    %1046 = vmatpush.bf16.msra.mxu0 %v956
    %1047 = vmatpush.bf16.msra.mxu0 %v954
    %1048 = vmatmul.bf16.gmra.mxu0 %v802
    %v1049 = vpop.f32.mrf.mxu0
    %v1050 = vadd.f32 %v1037, %v1049
    %v1051 = vpop.f32.mrf.mxu0
    %1052 = vdwg.mxu0
    %v1053 = vmax.f32 %v1024, 0.0
    %v1054 = vmax.f32 %v1050, 0.0
    %v1055 = vpack.c.bf16 %v1053, %v1053
    %v1056 = vpack.c.bf16 %v1054, %v1054
    %v1057 = vld [vmem:[#allocation9] sm:$0xff]
    %v1058 = vld [vmem:[#allocation9 + $0x8] sm:$0xff]
    %v1059 = vld [vmem:[#allocation9 + $0x10] sm:$0xff]
    %v1060 = vld [vmem:[#allocation9 + $0x18] sm:$0xff]
    %v1061 = vld [vmem:[#allocation9 + $0x20] sm:$0xff]
    %v1062 = vld [vmem:[#allocation9 + $0x28] sm:$0xff]
    %v1063 = vld [vmem:[#allocation9 + $0x30] sm:$0xff]
    %v1064 = vld [vmem:[#allocation9 + $0x38] sm:$0xff]
    %v1065 = vld [vmem:[#allocation9 + $0x40] sm:$0xff]
    %v1066 = vld [vmem:[#allocation9 + $0x48] sm:$0xff]
    %v1067 = vld [vmem:[#allocation9 + $0x50] sm:$0xff]
    %v1068 = vld [vmem:[#allocation9 + $0x58] sm:$0xff]
    %v1069 = vld [vmem:[#allocation9 + $0x60] sm:$0xff]
    %v1070 = vld [vmem:[#allocation9 + $0x68] sm:$0xff]
    %v1071 = vld [vmem:[#allocation9 + $0x70] sm:$0xff]
    %v1072 = vld [vmem:[#allocation9 + $0x78] sm:$0xff]
    %v1073 = vld [vmem:[#allocation9 + $0x80] sm:$0xff]
    %v1074 = vld [vmem:[#allocation9 + $0x88] sm:$0xff]
    %v1075 = vld [vmem:[#allocation9 + $0x90] sm:$0xff]
    %v1076 = vld [vmem:[#allocation9 + $0x98] sm:$0xff]
    %v1077 = vld [vmem:[#allocation9 + $0xa0] sm:$0xff]
    %v1078 = vld [vmem:[#allocation9 + $0xa8] sm:$0xff]
    %v1079 = vld [vmem:[#allocation9 + $0xb0] sm:$0xff]
    %v1080 = vld [vmem:[#allocation9 + $0xb8] sm:$0xff]
    %v1081 = vld [vmem:[#allocation9 + $0xc0] sm:$0xff]
    %v1082 = vld [vmem:[#allocation9 + $0xc8] sm:$0xff]
    %v1083 = vld [vmem:[#allocation9 + $0xd0] sm:$0xff]
    %v1084 = vld [vmem:[#allocation9 + $0xd8] sm:$0xff]
    %v1085 = vld [vmem:[#allocation9 + $0xe0] sm:$0xff]
    %v1086 = vld [vmem:[#allocation9 + $0xe8] sm:$0xff]
    %v1087 = vld [vmem:[#allocation9 + $0xf0] sm:$0xff]
    %v1088 = vld [vmem:[#allocation9 + $0xf8] sm:$0xff]
    %v1089 = vld [vmem:[%s11] sm:$0x3]
    %v1091 = vperm.slane %v1089, 0
    %v1092 = vperm.slane %v1089, 1
    %v1127 = vunpack.c.l.b16 %v1057
    %v1128 = vunpack.c.h.b16 %v1057
    %v1129 = vunpack.c.l.b16 %v1058
    %v1130 = vunpack.c.h.b16 %v1058
    %v1131 = vunpack.c.l.b16 %v1059
    %v1132 = vunpack.c.h.b16 %v1059
    %v1133 = vunpack.c.l.b16 %v1060
    %v1134 = vunpack.c.h.b16 %v1060
    %v1135 = vunpack.c.l.b16 %v1061
    %v1136 = vunpack.c.h.b16 %v1061
    %v1137 = vunpack.c.l.b16 %v1062
    %v1138 = vunpack.c.h.b16 %v1062
    %v1139 = vunpack.c.l.b16 %v1063
    %v1140 = vunpack.c.h.b16 %v1063
    %v1141 = vunpack.c.l.b16 %v1064
    %v1142 = vunpack.c.h.b16 %v1064
    %v1143 = vunpack.c.l.b16 %v1065
    %v1144 = vunpack.c.h.b16 %v1065
    %v1145 = vunpack.c.l.b16 %v1066
    %v1146 = vunpack.c.h.b16 %v1066
    %v1147 = vunpack.c.l.b16 %v1067
    %v1148 = vunpack.c.h.b16 %v1067
    %v1149 = vunpack.c.l.b16 %v1068
    %v1150 = vunpack.c.h.b16 %v1068
    %v1151 = vunpack.c.l.b16 %v1069
    %v1152 = vunpack.c.h.b16 %v1069
    %v1153 = vunpack.c.l.b16 %v1070
    %v1154 = vunpack.c.h.b16 %v1070
    %v1155 = vunpack.c.l.b16 %v1071
    %v1156 = vunpack.c.h.b16 %v1071
    %v1157 = vunpack.c.l.b16 %v1072
    %v1158 = vunpack.c.h.b16 %v1072
    %v1159 = vunpack.c.l.b16 %v1073
    %v1160 = vunpack.c.h.b16 %v1073
    %v1161 = vunpack.c.l.b16 %v1074
    %v1162 = vunpack.c.h.b16 %v1074
    %v1163 = vunpack.c.l.b16 %v1075
    %v1164 = vunpack.c.h.b16 %v1075
    %v1165 = vunpack.c.l.b16 %v1076
    %v1166 = vunpack.c.h.b16 %v1076
    %v1167 = vunpack.c.l.b16 %v1077
    %v1168 = vunpack.c.h.b16 %v1077
    %v1169 = vunpack.c.l.b16 %v1078
    %v1170 = vunpack.c.h.b16 %v1078
    %v1171 = vunpack.c.l.b16 %v1079
    %v1172 = vunpack.c.h.b16 %v1079
    %v1173 = vunpack.c.l.b16 %v1080
    %v1174 = vunpack.c.h.b16 %v1080
    %v1175 = vunpack.c.l.b16 %v1081
    %v1176 = vunpack.c.h.b16 %v1081
    %v1177 = vunpack.c.l.b16 %v1082
    %v1178 = vunpack.c.h.b16 %v1082
    %v1179 = vunpack.c.l.b16 %v1083
    %v1180 = vunpack.c.h.b16 %v1083
    %v1181 = vunpack.c.l.b16 %v1084
    %v1182 = vunpack.c.h.b16 %v1084
    %v1183 = vunpack.c.l.b16 %v1085
    %v1184 = vunpack.c.h.b16 %v1085
    %v1185 = vunpack.c.l.b16 %v1086
    %v1186 = vunpack.c.h.b16 %v1086
    %v1187 = vunpack.c.l.b16 %v1087
    %v1188 = vunpack.c.h.b16 %v1087
    %v1189 = vunpack.c.l.b16 %v1088
    %v1190 = vunpack.c.h.b16 %v1088
    %v1191 = vpack.c.b16 %v1129, %v1127
    %v1192 = vpack.c.b16 %v1130, %v1128
    %v1193 = vpack.c.b16 %v1133, %v1131
    %v1194 = vpack.c.b16 %v1134, %v1132
    %v1195 = vpack.c.b16 %v1137, %v1135
    %v1196 = vpack.c.b16 %v1138, %v1136
    %v1197 = vpack.c.b16 %v1141, %v1139
    %v1198 = vpack.c.b16 %v1142, %v1140
    %v1199 = vpack.c.b16 %v1145, %v1143
    %v1200 = vpack.c.b16 %v1146, %v1144
    %v1201 = vpack.c.b16 %v1149, %v1147
    %v1202 = vpack.c.b16 %v1150, %v1148
    %v1203 = vpack.c.b16 %v1153, %v1151
    %v1204 = vpack.c.b16 %v1154, %v1152
    %v1205 = vpack.c.b16 %v1157, %v1155
    %v1206 = vpack.c.b16 %v1158, %v1156
    %v1207 = vpack.c.b16 %v1161, %v1159
    %v1208 = vpack.c.b16 %v1162, %v1160
    %v1209 = vpack.c.b16 %v1165, %v1163
    %v1210 = vpack.c.b16 %v1166, %v1164
    %v1211 = vpack.c.b16 %v1169, %v1167
    %v1212 = vpack.c.b16 %v1170, %v1168
    %v1213 = vpack.c.b16 %v1173, %v1171
    %v1214 = vpack.c.b16 %v1174, %v1172
    %v1215 = vpack.c.b16 %v1177, %v1175
    %v1216 = vpack.c.b16 %v1178, %v1176
    %v1217 = vpack.c.b16 %v1181, %v1179
    %v1218 = vpack.c.b16 %v1182, %v1180
    %v1219 = vpack.c.b16 %v1185, %v1183
    %v1220 = vpack.c.b16 %v1186, %v1184
    %v1221 = vpack.c.b16 %v1189, %v1187
    %v1222 = vpack.c.b16 %v1190, %v1188
    %1255 = vmatpush.bf16.msra.mxu0 %v1205
    %1256 = vmatpush.bf16.msra.mxu0 %v1203
    %1257 = vmatpush.bf16.msra.mxu0 %v1201
    %1258 = vmatpush.bf16.msra.mxu0 %v1199
    %1259 = vmatpush.bf16.msra.mxu0 %v1197
    %1260 = vmatpush.bf16.msra.mxu0 %v1195
    %1261 = vmatpush.bf16.msra.mxu0 %v1193
    %1262 = vmatpush.bf16.msra.mxu0 %v1191
    %1263 = vmatmul.bf16.gmra.mxu0 %v1055
    %v1264 = vpop.f32.mrf.mxu0
    %v1265 = vadd.f32 %v1091, %v1264
    %v1266 = vpop.f32.mrf.mxu0
    %1267 = vdwg.mxu0
    %1268 = vmatpush.bf16.msra.mxu0 %v1221
    %1269 = vmatpush.bf16.msra.mxu0 %v1219
    %1270 = vmatpush.bf16.msra.mxu0 %v1217
    %1271 = vmatpush.bf16.msra.mxu0 %v1215
    %1272 = vmatpush.bf16.msra.mxu0 %v1213
    %1273 = vmatpush.bf16.msra.mxu0 %v1211
    %1274 = vmatpush.bf16.msra.mxu0 %v1209
    %1275 = vmatpush.bf16.msra.mxu0 %v1207
    %1276 = vmatmul.bf16.gmra.mxu0 %v1056
    %v1277 = vpop.f32.mrf.mxu0
    %v1278 = vadd.f32 %v1265, %v1277
    %v1279 = vpop.f32.mrf.mxu0
    %1280 = vdwg.mxu0
    %1281 = vmatpush.bf16.msra.mxu0 %v1206
    %1282 = vmatpush.bf16.msra.mxu0 %v1204
    %1283 = vmatpush.bf16.msra.mxu0 %v1202
    %1284 = vmatpush.bf16.msra.mxu0 %v1200
    %1285 = vmatpush.bf16.msra.mxu0 %v1198
    %1286 = vmatpush.bf16.msra.mxu0 %v1196
    %1287 = vmatpush.bf16.msra.mxu0 %v1194
    %1288 = vmatpush.bf16.msra.mxu0 %v1192
    %1289 = vmatmul.bf16.gmra.mxu0 %v1055
    %v1290 = vpop.f32.mrf.mxu0
    %v1291 = vadd.f32 %v1092, %v1290
    %v1292 = vpop.f32.mrf.mxu0
    %1293 = vdwg.mxu0
    %1294 = vmatpush.bf16.msra.mxu0 %v1222
    %1295 = vmatpush.bf16.msra.mxu0 %v1220
    %1296 = vmatpush.bf16.msra.mxu0 %v1218
    %1297 = vmatpush.bf16.msra.mxu0 %v1216
    %1298 = vmatpush.bf16.msra.mxu0 %v1214
    %1299 = vmatpush.bf16.msra.mxu0 %v1212
    %1300 = vmatpush.bf16.msra.mxu0 %v1210
    %1301 = vmatpush.bf16.msra.mxu0 %v1208
    %1302 = vmatmul.bf16.gmra.mxu0 %v1056
    %v1303 = vpop.f32.mrf.mxu0
    %v1304 = vadd.f32 %v1291, %v1303
    %v1305 = vpop.f32.mrf.mxu0
    %1306 = vdwg.mxu0
    %v1307 = vmax.f32 %v1278, 0.0
    %v1308 = vmax.f32 %v1304, 0.0
    %v1309 = vpack.c.bf16 %v1307, %v1307
    %v1310 = vpack.c.bf16 %v1308, %v1308
    %v1311 = vld [vmem:[#allocation10] sm:$0xff]
    %v1312 = vld [vmem:[#allocation10 + $0x8] sm:$0xff]
    %v1313 = vld [vmem:[#allocation10 + $0x10] sm:$0xff]
    %v1314 = vld [vmem:[#allocation10 + $0x18] sm:$0xff]
    %v1315 = vld [vmem:[#allocation10 + $0x20] sm:$0xff]
    %v1316 = vld [vmem:[#allocation10 + $0x28] sm:$0xff]
    %v1317 = vld [vmem:[#allocation10 + $0x30] sm:$0xff]
    %v1318 = vld [vmem:[#allocation10 + $0x38] sm:$0xff]
    %v1319 = vld [vmem:[#allocation10 + $0x40] sm:$0xff]
    %v1320 = vld [vmem:[#allocation10 + $0x48] sm:$0xff]
    %v1321 = vld [vmem:[#allocation10 + $0x50] sm:$0xff]
    %v1322 = vld [vmem:[#allocation10 + $0x58] sm:$0xff]
    %v1323 = vld [vmem:[#allocation10 + $0x60] sm:$0xff]
    %v1324 = vld [vmem:[#allocation10 + $0x68] sm:$0xff]
    %v1325 = vld [vmem:[#allocation10 + $0x70] sm:$0xff]
    %v1326 = vld [vmem:[#allocation10 + $0x78] sm:$0xff]
    %v1327 = vld [vmem:[#allocation10 + $0x80] sm:$0xff]
    %v1328 = vld [vmem:[#allocation10 + $0x88] sm:$0xff]
    %v1329 = vld [vmem:[#allocation10 + $0x90] sm:$0xff]
    %v1330 = vld [vmem:[#allocation10 + $0x98] sm:$0xff]
    %v1331 = vld [vmem:[#allocation10 + $0xa0] sm:$0xff]
    %v1332 = vld [vmem:[#allocation10 + $0xa8] sm:$0xff]
    %v1333 = vld [vmem:[#allocation10 + $0xb0] sm:$0xff]
    %v1334 = vld [vmem:[#allocation10 + $0xb8] sm:$0xff]
    %v1335 = vld [vmem:[#allocation10 + $0xc0] sm:$0xff]
    %v1336 = vld [vmem:[#allocation10 + $0xc8] sm:$0xff]
    %v1337 = vld [vmem:[#allocation10 + $0xd0] sm:$0xff]
    %v1338 = vld [vmem:[#allocation10 + $0xd8] sm:$0xff]
    %v1339 = vld [vmem:[#allocation10 + $0xe0] sm:$0xff]
    %v1340 = vld [vmem:[#allocation10 + $0xe8] sm:$0xff]
    %v1341 = vld [vmem:[#allocation10 + $0xf0] sm:$0xff]
    %v1342 = vld [vmem:[#allocation10 + $0xf8] sm:$0xff]
    %v1343 = vld [vmem:[%s13] sm:$0x3]
    %v1345 = vperm.slane %v1343, 0
    %v1346 = vperm.slane %v1343, 1
    %v1381 = vunpack.c.l.b16 %v1311
    %v1382 = vunpack.c.h.b16 %v1311
    %v1383 = vunpack.c.l.b16 %v1312
    %v1384 = vunpack.c.h.b16 %v1312
    %v1385 = vunpack.c.l.b16 %v1313
    %v1386 = vunpack.c.h.b16 %v1313
    %v1387 = vunpack.c.l.b16 %v1314
    %v1388 = vunpack.c.h.b16 %v1314
    %v1389 = vunpack.c.l.b16 %v1315
    %v1390 = vunpack.c.h.b16 %v1315
    %v1391 = vunpack.c.l.b16 %v1316
    %v1392 = vunpack.c.h.b16 %v1316
    %v1393 = vunpack.c.l.b16 %v1317
    %v1394 = vunpack.c.h.b16 %v1317
    %v1395 = vunpack.c.l.b16 %v1318
    %v1396 = vunpack.c.h.b16 %v1318
    %v1397 = vunpack.c.l.b16 %v1319
    %v1398 = vunpack.c.h.b16 %v1319
    %v1399 = vunpack.c.l.b16 %v1320
    %v1400 = vunpack.c.h.b16 %v1320
    %v1401 = vunpack.c.l.b16 %v1321
    %v1402 = vunpack.c.h.b16 %v1321
    %v1403 = vunpack.c.l.b16 %v1322
    %v1404 = vunpack.c.h.b16 %v1322
    %v1405 = vunpack.c.l.b16 %v1323
    %v1406 = vunpack.c.h.b16 %v1323
    %v1407 = vunpack.c.l.b16 %v1324
    %v1408 = vunpack.c.h.b16 %v1324
    %v1409 = vunpack.c.l.b16 %v1325
    %v1410 = vunpack.c.h.b16 %v1325
    %v1411 = vunpack.c.l.b16 %v1326
    %v1412 = vunpack.c.h.b16 %v1326
    %v1413 = vunpack.c.l.b16 %v1327
    %v1414 = vunpack.c.h.b16 %v1327
    %v1415 = vunpack.c.l.b16 %v1328
    %v1416 = vunpack.c.h.b16 %v1328
    %v1417 = vunpack.c.l.b16 %v1329
    %v1418 = vunpack.c.h.b16 %v1329
    %v1419 = vunpack.c.l.b16 %v1330
    %v1420 = vunpack.c.h.b16 %v1330
    %v1421 = vunpack.c.l.b16 %v1331
    %v1422 = vunpack.c.h.b16 %v1331
    %v1423 = vunpack.c.l.b16 %v1332
    %v1424 = vunpack.c.h.b16 %v1332
    %v1425 = vunpack.c.l.b16 %v1333
    %v1426 = vunpack.c.h.b16 %v1333
    %v1427 = vunpack.c.l.b16 %v1334
    %v1428 = vunpack.c.h.b16 %v1334
    %v1429 = vunpack.c.l.b16 %v1335
    %v1430 = vunpack.c.h.b16 %v1335
    %v1431 = vunpack.c.l.b16 %v1336
    %v1432 = vunpack.c.h.b16 %v1336
    %v1433 = vunpack.c.l.b16 %v1337
    %v1434 = vunpack.c.h.b16 %v1337
    %v1435 = vunpack.c.l.b16 %v1338
    %v1436 = vunpack.c.h.b16 %v1338
    %v1437 = vunpack.c.l.b16 %v1339
    %v1438 = vunpack.c.h.b16 %v1339
    %v1439 = vunpack.c.l.b16 %v1340
    %v1440 = vunpack.c.h.b16 %v1340
    %v1441 = vunpack.c.l.b16 %v1341
    %v1442 = vunpack.c.h.b16 %v1341
    %v1443 = vunpack.c.l.b16 %v1342
    %v1444 = vunpack.c.h.b16 %v1342
    %v1445 = vpack.c.b16 %v1383, %v1381
    %v1446 = vpack.c.b16 %v1384, %v1382
    %v1447 = vpack.c.b16 %v1387, %v1385
    %v1448 = vpack.c.b16 %v1388, %v1386
    %v1449 = vpack.c.b16 %v1391, %v1389
    %v1450 = vpack.c.b16 %v1392, %v1390
    %v1451 = vpack.c.b16 %v1395, %v1393
    %v1452 = vpack.c.b16 %v1396, %v1394
    %v1453 = vpack.c.b16 %v1399, %v1397
    %v1454 = vpack.c.b16 %v1400, %v1398
    %v1455 = vpack.c.b16 %v1403, %v1401
    %v1456 = vpack.c.b16 %v1404, %v1402
    %v1457 = vpack.c.b16 %v1407, %v1405
    %v1458 = vpack.c.b16 %v1408, %v1406
    %v1459 = vpack.c.b16 %v1411, %v1409
    %v1460 = vpack.c.b16 %v1412, %v1410
    %v1461 = vpack.c.b16 %v1415, %v1413
    %v1462 = vpack.c.b16 %v1416, %v1414
    %v1463 = vpack.c.b16 %v1419, %v1417
    %v1464 = vpack.c.b16 %v1420, %v1418
    %v1465 = vpack.c.b16 %v1423, %v1421
    %v1466 = vpack.c.b16 %v1424, %v1422
    %v1467 = vpack.c.b16 %v1427, %v1425
    %v1468 = vpack.c.b16 %v1428, %v1426
    %v1469 = vpack.c.b16 %v1431, %v1429
    %v1470 = vpack.c.b16 %v1432, %v1430
    %v1471 = vpack.c.b16 %v1435, %v1433
    %v1472 = vpack.c.b16 %v1436, %v1434
    %v1473 = vpack.c.b16 %v1439, %v1437
    %v1474 = vpack.c.b16 %v1440, %v1438
    %v1475 = vpack.c.b16 %v1443, %v1441
    %v1476 = vpack.c.b16 %v1444, %v1442
    %1509 = vmatpush.bf16.msra.mxu0 %v1459
    %1510 = vmatpush.bf16.msra.mxu0 %v1457
    %1511 = vmatpush.bf16.msra.mxu0 %v1455
    %1512 = vmatpush.bf16.msra.mxu0 %v1453
    %1513 = vmatpush.bf16.msra.mxu0 %v1451
    %1514 = vmatpush.bf16.msra.mxu0 %v1449
    %1515 = vmatpush.bf16.msra.mxu0 %v1447
    %1516 = vmatpush.bf16.msra.mxu0 %v1445
    %1517 = vmatmul.bf16.gmra.mxu0 %v1309
    %v1518 = vpop.f32.mrf.mxu0
    %v1519 = vadd.f32 %v1345, %v1518
    %v1520 = vpop.f32.mrf.mxu0
    %1521 = vdwg.mxu0
    %1522 = vmatpush.bf16.msra.mxu0 %v1475
    %1523 = vmatpush.bf16.msra.mxu0 %v1473
    %1524 = vmatpush.bf16.msra.mxu0 %v1471
    %1525 = vmatpush.bf16.msra.mxu0 %v1469
    %1526 = vmatpush.bf16.msra.mxu0 %v1467
    %1527 = vmatpush.bf16.msra.mxu0 %v1465
    %1528 = vmatpush.bf16.msra.mxu0 %v1463
    %1529 = vmatpush.bf16.msra.mxu0 %v1461
    %1530 = vmatmul.bf16.gmra.mxu0 %v1310
    %v1531 = vpop.f32.mrf.mxu0
    %v1532 = vadd.f32 %v1519, %v1531
    %v1533 = vpop.f32.mrf.mxu0
    %1534 = vdwg.mxu0
    %1535 = vmatpush.bf16.msra.mxu0 %v1460
    %1536 = vmatpush.bf16.msra.mxu0 %v1458
    %1537 = vmatpush.bf16.msra.mxu0 %v1456
    %1538 = vmatpush.bf16.msra.mxu0 %v1454
    %1539 = vmatpush.bf16.msra.mxu0 %v1452
    %1540 = vmatpush.bf16.msra.mxu0 %v1450
    %1541 = vmatpush.bf16.msra.mxu0 %v1448
    %1542 = vmatpush.bf16.msra.mxu0 %v1446
    %1543 = vmatmul.bf16.gmra.mxu0 %v1309
    %v1544 = vpop.f32.mrf.mxu0
    %v1545 = vadd.f32 %v1346, %v1544
    %v1546 = vpop.f32.mrf.mxu0
    %1547 = vdwg.mxu0
    %1548 = vmatpush.bf16.msra.mxu0 %v1476
    %1549 = vmatpush.bf16.msra.mxu0 %v1474
    %1550 = vmatpush.bf16.msra.mxu0 %v1472
    %1551 = vmatpush.bf16.msra.mxu0 %v1470
    %1552 = vmatpush.bf16.msra.mxu0 %v1468
    %1553 = vmatpush.bf16.msra.mxu0 %v1466
    %1554 = vmatpush.bf16.msra.mxu0 %v1464
    %1555 = vmatpush.bf16.msra.mxu0 %v1462
    %1556 = vmatmul.bf16.gmra.mxu0 %v1310
    %v1557 = vpop.f32.mrf.mxu0
    %v1558 = vadd.f32 %v1545, %v1557
    %v1559 = vpop.f32.mrf.mxu0
    %1560 = vdwg.mxu0
    %v1561 = vmax.f32 %v1532, 0.0
    %v1562 = vmax.f32 %v1558, 0.0
    %v1563 = vpack.c.bf16 %v1561, %v1561
    %v1564 = vpack.c.bf16 %v1562, %v1562
    %v1565 = vld [vmem:[#allocation12] sm:$0xf]
    %v1566 = vld [vmem:[#allocation12 + $0x4] sm:$0xf]
    %v1567 = vld [vmem:[#allocation12 + $0x8] sm:$0xf]
    %v1568 = vld [vmem:[#allocation12 + $0xc] sm:$0xf]
    %v1569 = vld [vmem:[#allocation12 + $0x10] sm:$0xf]
    %v1570 = vld [vmem:[#allocation12 + $0x14] sm:$0xf]
    %v1571 = vld [vmem:[#allocation12 + $0x18] sm:$0xf]
    %v1572 = vld [vmem:[#allocation12 + $0x1c] sm:$0xf]
    %v1573 = vld [vmem:[#allocation12 + $0x20] sm:$0xf]
    %v1574 = vld [vmem:[#allocation12 + $0x24] sm:$0xf]
    %v1575 = vld [vmem:[#allocation12 + $0x28] sm:$0xf]
    %v1576 = vld [vmem:[#allocation12 + $0x2c] sm:$0xf]
    %v1577 = vld [vmem:[#allocation12 + $0x30] sm:$0xf]
    %v1578 = vld [vmem:[#allocation12 + $0x34] sm:$0xf]
    %v1579 = vld [vmem:[#allocation12 + $0x38] sm:$0xf]
    %v1580 = vld [vmem:[#allocation12 + $0x3c] sm:$0xf]
    %v1581 = vld [vmem:[#allocation12 + $0x40] sm:$0xf]
    %v1582 = vld [vmem:[#allocation12 + $0x44] sm:$0xf]
    %v1583 = vld [vmem:[#allocation12 + $0x48] sm:$0xf]
    %v1584 = vld [vmem:[#allocation12 + $0x4c] sm:$0xf]
    %v1585 = vld [vmem:[#allocation12 + $0x50] sm:$0xf]
    %v1586 = vld [vmem:[#allocation12 + $0x54] sm:$0xf]
    %v1587 = vld [vmem:[#allocation12 + $0x58] sm:$0xf]
    %v1588 = vld [vmem:[#allocation12 + $0x5c] sm:$0xf]
    %v1589 = vld [vmem:[#allocation12 + $0x60] sm:$0xf]
    %v1590 = vld [vmem:[#allocation12 + $0x64] sm:$0xf]
    %v1591 = vld [vmem:[#allocation12 + $0x68] sm:$0xf]
    %v1592 = vld [vmem:[#allocation12 + $0x6c] sm:$0xf]
    %v1593 = vld [vmem:[#allocation12 + $0x70] sm:$0xf]
    %v1594 = vld [vmem:[#allocation12 + $0x74] sm:$0xf]
    %v1595 = vld [vmem:[#allocation12 + $0x78] sm:$0xf]
    %v1596 = vld [vmem:[#allocation12 + $0x7c] sm:$0xf]
    %v1597 = vld [vmem:[%s15] sm:$0x1]
    %v1599 = vperm.slane %v1597, 0
    %v1633 = vunpack.c.l.b16 %v1565
    %v1634 = vunpack.c.l.b16 %v1566
    %v1635 = vunpack.c.l.b16 %v1567
    %v1636 = vunpack.c.l.b16 %v1568
    %v1637 = vunpack.c.l.b16 %v1569
    %v1638 = vunpack.c.l.b16 %v1570
    %v1639 = vunpack.c.l.b16 %v1571
    %v1640 = vunpack.c.l.b16 %v1572
    %v1641 = vunpack.c.l.b16 %v1573
    %v1642 = vunpack.c.l.b16 %v1574
    %v1643 = vunpack.c.l.b16 %v1575
    %v1644 = vunpack.c.l.b16 %v1576
    %v1645 = vunpack.c.l.b16 %v1577
    %v1646 = vunpack.c.l.b16 %v1578
    %v1647 = vunpack.c.l.b16 %v1579
    %v1648 = vunpack.c.l.b16 %v1580
    %v1649 = vunpack.c.l.b16 %v1581
    %v1650 = vunpack.c.l.b16 %v1582
    %v1651 = vunpack.c.l.b16 %v1583
    %v1652 = vunpack.c.l.b16 %v1584
    %v1653 = vunpack.c.l.b16 %v1585
    %v1654 = vunpack.c.l.b16 %v1586
    %v1655 = vunpack.c.l.b16 %v1587
    %v1656 = vunpack.c.l.b16 %v1588
    %v1657 = vunpack.c.l.b16 %v1589
    %v1658 = vunpack.c.l.b16 %v1590
    %v1659 = vunpack.c.l.b16 %v1591
    %v1660 = vunpack.c.l.b16 %v1592
    %v1661 = vunpack.c.l.b16 %v1593
    %v1662 = vunpack.c.l.b16 %v1594
    %v1663 = vunpack.c.l.b16 %v1595
    %v1664 = vunpack.c.l.b16 %v1596
    %v1665 = vpack.c.b16 %v1634, %v1633
    %v1666 = vpack.c.b16 %v1636, %v1635
    %v1667 = vpack.c.b16 %v1638, %v1637
    %v1668 = vpack.c.b16 %v1640, %v1639
    %v1669 = vpack.c.b16 %v1642, %v1641
    %v1670 = vpack.c.b16 %v1644, %v1643
    %v1671 = vpack.c.b16 %v1646, %v1645
    %v1672 = vpack.c.b16 %v1648, %v1647
    %v1673 = vpack.c.b16 %v1650, %v1649
    %v1674 = vpack.c.b16 %v1652, %v1651
    %v1675 = vpack.c.b16 %v1654, %v1653
    %v1676 = vpack.c.b16 %v1656, %v1655
    %v1677 = vpack.c.b16 %v1658, %v1657
    %v1678 = vpack.c.b16 %v1660, %v1659
    %v1679 = vpack.c.b16 %v1662, %v1661
    %v1680 = vpack.c.b16 %v1664, %v1663
    %1697 = vmatpush.bf16.msra.mxu0 %v1672
    %1698 = vmatpush.bf16.msra.mxu0 %v1671
    %1699 = vmatpush.bf16.msra.mxu0 %v1670
    %1700 = vmatpush.bf16.msra.mxu0 %v1669
    %1701 = vmatpush.bf16.msra.mxu0 %v1668
    %1702 = vmatpush.bf16.msra.mxu0 %v1667
    %1703 = vmatpush.bf16.msra.mxu0 %v1666
    %1704 = vmatpush.bf16.msra.mxu0 %v1665
    %1705 = vmatmul.bf16.gmra.mxu0 %v1563
    %v1706 = vpop.f32.mrf.mxu0
    %v1707 = vadd.f32 %v1599, %v1706
    %v1708 = vpop.f32.mrf.mxu0
    %1709 = vdwg.mxu0
    %1710 = vmatpush.bf16.msra.mxu0 %v1680
    %1711 = vmatpush.bf16.msra.mxu0 %v1679
    %1712 = vmatpush.bf16.msra.mxu0 %v1678
    %1713 = vmatpush.bf16.msra.mxu0 %v1677
    %1714 = vmatpush.bf16.msra.mxu0 %v1676
    %1715 = vmatpush.bf16.msra.mxu0 %v1675
    %1716 = vmatpush.bf16.msra.mxu0 %v1674
    %1717 = vmatpush.bf16.msra.mxu0 %v1673
    %1718 = vmatmul.bf16.gmra.mxu0 %v1564
    %v1719 = vpop.f32.mrf.mxu0
    %v1720 = vadd.f32 %v1707, %v1719
    %v1721 = vpop.f32.mrf.mxu0
    %1722 = vdwg.mxu0
    %v1723 = vmax.f32 %v1720, 0.0
    %v1724 = vld [vmem:[%s1] sm:$0x1]
    %v1726 = vperm.slane %v1724, 0
    %v1728 = vadd.f32 %v1723, %v1726
    %1729 = vmax.xlane.f32.xlu0 %v1728
    %v1730 = vpop.xlane.xlu0 %1729
    %v1731 = vsub.f32 %v1728, %v1730
    %v1732 = vmul.f32 %v1731, 1.442695
    %v1733 = vpow.pop %v1732
    %1734 = vadd.xlane.f32.xlu0 %v1733
    %v1735 = vpop.xlane.xlu0 %1734
    %v1736 = vrcp.pop %v1735
    %v1737 = vmul.f32 %v1735, %v1736
    %v1738 = vsub.f32 1.0, %v1737
    %v1739 = vmul.f32 %v1736, %v1738
    %v1740 = vadd.f32 %v1736, %v1739
    %vm1741 = vweird.f32 %v1735
    %vm1742 = vweird.f32 %v1736
    %vm1743 = vmor %vm1741, %vm1742
    %v1744 = vsel %vm1743, %v1736, %v1740
    %v1745 = vand.u32 2147483647, %v1735
    %vm1746 = vcmp.eq.f32.partialorder %v1745, 8.507059e+37
    %v1747 = vand.u32 %v1735, 2147483648
    %v1748 = vor.u32 1.1754944e-38, %v1747
    %v1749 = vsel %vm1746, %v1748, %v1744
    %v1750 = vmul.f32 %v1733, %v1749
    %1751 = vst [vmem:[%s16] sm:$0xff] %v1750
    // Predicated region
    $region94: #{chinet_forward.1} parent=1 // pred_check
      _
    $region95: #{chinet_forward.1} parent=1 // pred_check_branch
      %1753 = sbr.rel (0) target = $region97
    $region96: #{chinet_forward.1} parent=1 // pred_region
      _
    $region97: #{chinet_forward.1} parent=1 // pred_fallthru
      _
    // Predicated region
    $region98: #{chinet_forward.1} parent=1 // pred_check
      _
    $region99: #{chinet_forward.1} parent=1 // pred_check_branch
      %1755 = sbr.rel (0) target = $region101
    $region100: #{chinet_forward.1} parent=1 // pred_region
      _
    $region101: #{chinet_forward.1} parent=1 // pred_fallthru
      _
    %1756 = vsyncpa [#allocation3], 1
    %1757 = vsyncpa [#allocation5], 1
    %1758 = vsyncpa [#allocation8], 1
    %1759 = vsyncpa [#allocation11], 1

</llo_original>
